<compile_context>
chip_gen: v6e
topology: v6e:2x2x1
jax: 0.10.0
libtpu: 0.0.40
codegen_flags: <defaults>
</compile_context>

<pallas_src>
import math

import jax
import jax.numpy as jnp
from jax.experimental import pallas as pl
from jax.experimental.pallas import tpu as pltpu  # noqa: F401  (kept for CompilerParams if scaled up)

N_EMBD = 32
N_HEAD = 4
HEAD_DIM = N_EMBD // N_HEAD
SEQ = 8
BATCH = 2
LN_EPS = 1e-5


def _layer_norm(x, g, b):
    mu = jnp.mean(x, axis=-1, keepdims=True)
    var = jnp.mean((x - mu) ** 2, axis=-1, keepdims=True)
    return (x - mu) * jax.lax.rsqrt(var + LN_EPS) * g + b


def _gelu(x):
    # 0.5 * x * (1 + tanh(sqrt(2/pi) * (x + 0.044715 * x^3)))
    return 0.5 * x * (1.0 + jnp.tanh(0.7978845608028654 * (x + 0.044715 * x * x * x)))


def make_block_kernel(B, T, C, n_head):
    hd = C // n_head
    N = B * T
    inv_sqrt_d = 1.0 / math.sqrt(hd)

    def block_kernel(x_ref, maskadd_ref,
                     ln1_g_ref, ln1_b_ref,
                     w_attn_ref, b_attn_ref,
                     w_aproj_ref, b_aproj_ref,
                     ln2_g_ref, ln2_b_ref,
                     w_fc_ref, b_fc_ref,
                     w_mproj_ref, b_mproj_ref,
                     out_ref, present_ref):
        x = x_ref[...]                       # (B*T, C)
        mask_add = maskadd_ref[...]          # (B, T, T): 0.0 = attend, -10000.0 = masked

        # ---- ln_1 + c_attn: one fused qkv projection over all B*T rows ----
        h = _layer_norm(x, ln1_g_ref[...], ln1_b_ref[...])
        qkv = jnp.dot(h, w_attn_ref[...], preferred_element_type=jnp.float32) + b_attn_ref[...]

        # ---- present = (key, value): two lane-dense width-C stores, single output ----
        present_ref[0, :, :] = qkv[:, C:2 * C]
        present_ref[1, :, :] = qkv[:, 2 * C:3 * C]

        # ---- attention: B-batched 3-D einsums, static loop over heads ----
        head_outs = []
        for hh in range(n_head):
            lo = hh * hd
            q_h = qkv[:, lo:lo + hd].reshape(B, T, hd)                       # (B, T, hd)
            k_h = qkv[:, C + lo:C + lo + hd].reshape(B, T, hd)
            v_h = qkv[:, 2 * C + lo:2 * C + lo + hd].reshape(B, T, hd)

            s = jnp.einsum('bqd,bkd->bqk', q_h, k_h,
                           preferred_element_type=jnp.float32) * inv_sqrt_d
            s = s + mask_add                                                 # additive mask (vadd)
            s = s - jnp.max(s, axis=-1, keepdims=True)
            p = jnp.exp(s)
            p = p * pl.reciprocal(jnp.sum(p, axis=-1, keepdims=True), approx=True)
            o_h = jnp.einsum('bqk,bkd->bqd', p, v_h,
                             preferred_element_type=jnp.float32)
            head_outs.append(o_h.reshape(N, hd))

        a = jnp.concatenate(head_outs, axis=-1)                              # merge_heads -> (N, C)
        a = jnp.dot(a, w_aproj_ref[...], preferred_element_type=jnp.float32) + b_aproj_ref[...]

        x1 = x + a                                                           # residual 1

        # ---- ln_2 + MLP (all B*T rows at once) ----
        h2 = _layer_norm(x1, ln2_g_ref[...], ln2_b_ref[...])
        ff = jnp.dot(h2, w_fc_ref[...], preferred_element_type=jnp.float32) + b_fc_ref[...]
        ff = _gelu(ff)
        ff = jnp.dot(ff, w_mproj_ref[...], preferred_element_type=jnp.float32) + b_mproj_ref[...]

        out_ref[...] = x1 + ff                                               # residual 2

    return block_kernel


def gpt2_block(x, mask, params):
    B, T, C = x.shape
    n_head = N_HEAD
    hd = C // n_head
    N = B * T

    x_flat = x.reshape(N, C)
    # Additive mask precomputed in the wrapper: 0 where mask==1, -10000 where mask==0
    # (numerically equivalent to torch's masked_fill_(1 - mask, -10000.0) after softmax).
    mask_add = (mask.astype(x.dtype) - 1.0) * 10000.0

    kernel = make_block_kernel(B, T, C, n_head)

    out_flat, present_flat = pl.pallas_call(
        kernel,
        out_shape=(
            jax.ShapeDtypeStruct((N, C), x.dtype),
            jax.ShapeDtypeStruct((2, N, C), x.dtype),
        ),
    )(x_flat, mask_add, *params)

    out = out_flat.reshape(B, T, C)
    # (2, B*T, C) -> (2, B, H, T, hd): wrapper-side layout plumbing (free at these sizes).
    present = present_flat.reshape(2, B, T, n_head, hd).transpose(0, 1, 3, 2, 4)
    return out, present


def ref_block(x, mask, params):
    """Pure-JAX reference of the PyTorch Block forward (eval mode)."""
    (ln1_g, ln1_b, w_attn, b_attn, w_aproj, b_aproj,
     ln2_g, ln2_b, w_fc, b_fc, w_mproj, b_mproj) = params

    def ln(t, g, b):
        mu = t.mean(-1, keepdims=True)
        var = ((t - mu) ** 2).mean(-1, keepdims=True)
        return (t - mu) / jnp.sqrt(var + LN_EPS) * g + b

    h = ln(x, ln1_g, ln1_b)
    qkv = h @ w_attn + b_attn
    q, k, v = jnp.split(qkv, 3, axis=-1)

    def split_heads(t):
        Bq, Tq, Cq = t.shape
        return t.reshape(Bq, Tq, N_HEAD, HEAD_DIM).transpose(0, 2, 1, 3)

    q, k, v = split_heads(q), split_heads(k), split_heads(v)
    scores = (q @ jnp.swapaxes(k, -1, -2)) / math.sqrt(HEAD_DIM)
    scores = jnp.where(mask[:, None, :, :] > 0, scores, -10000.0)
    p = jax.nn.softmax(scores, axis=-1)
    a = p @ v
    a = a.transpose(0, 2, 1, 3).reshape(x.shape)
    a = a @ w_aproj + b_aproj
    x1 = x + a
    h2 = ln(x1, ln2_g, ln2_b)
    ff = _gelu(h2 @ w_fc + b_fc)
    ff = ff @ w_mproj + b_mproj
    out = x1 + ff
    present = jnp.stack([k, v], axis=0)
    return out, present


if __name__ == "__main__":
    key = jax.random.PRNGKey(0)
    keys = jax.random.split(key, 6)
    C = N_EMBD

    # Conv1D weights: normal(std=0.02), biases zero; LayerNorm: gamma=1, beta=0.
    params = (
        jnp.ones((1, C), jnp.float32),                                      # ln_1 gamma
        jnp.zeros((1, C), jnp.float32),                                     # ln_1 beta
        0.02 * jax.random.normal(keys[0], (C, 3 * C), jnp.float32),         # c_attn W
        jnp.zeros((1, 3 * C), jnp.float32),                                 # c_attn b
        0.02 * jax.random.normal(keys[1], (C, C), jnp.float32),             # attn c_proj W
        jnp.zeros((1, C), jnp.float32),                                     # attn c_proj b
        jnp.ones((1, C), jnp.float32),                                      # ln_2 gamma
        jnp.zeros((1, C), jnp.float32),                                     # ln_2 beta
        0.02 * jax.random.normal(keys[2], (C, 4 * C), jnp.float32),         # mlp c_fc W
        jnp.zeros((1, 4 * C), jnp.float32),                                 # mlp c_fc b
        0.02 * jax.random.normal(keys[3], (4 * C, C), jnp.float32),         # mlp c_proj W
        jnp.zeros((1, C), jnp.float32),                                     # mlp c_proj b
    )

    x = jax.random.normal(keys[4], (BATCH, SEQ, N_EMBD), jnp.float32)
    mask = jnp.tril(jnp.ones((SEQ, SEQ), jnp.float32))[None].repeat(BATCH, axis=0)

    out, present = gpt2_block(x, mask, params)
    out = jax.block_until_ready(out)
    present = jax.block_until_ready(present)

    ref_out, ref_present = ref_block(x, mask, params)
    assert out.shape == (BATCH, SEQ, N_EMBD)
    assert present.shape == (2, BATCH, N_HEAD, SEQ, HEAD_DIM)
    # out tolerance slightly loosened to cover pl.reciprocal(approx=True) in the softmax.
    assert jnp.allclose(out, ref_out, atol=1e-3, rtol=1e-3)
    assert jnp.allclose(present, ref_present, atol=1e-4, rtol=1e-4)

    print("KERNEL_OK")
</pallas_src>

<mosaic_0001>
module attributes {stable_mosaic.version = 11 : i64} {
  func.func @block_kernel(%arg0: memref<16x32xf32, #tpu.memory_space<vmem>>, %arg1: memref<2x8x8xf32, #tpu.memory_space<vmem>>, %arg2: memref<1x32xf32, #tpu.memory_space<vmem>>, %arg3: memref<1x32xf32, #tpu.memory_space<vmem>>, %arg4: memref<32x96xf32, #tpu.memory_space<vmem>>, %arg5: memref<1x96xf32, #tpu.memory_space<vmem>>, %arg6: memref<32x32xf32, #tpu.memory_space<vmem>>, %arg7: memref<1x32xf32, #tpu.memory_space<vmem>>, %arg8: memref<1x32xf32, #tpu.memory_space<vmem>>, %arg9: memref<1x32xf32, #tpu.memory_space<vmem>>, %arg10: memref<32x128xf32, #tpu.memory_space<vmem>>, %arg11: memref<1x128xf32, #tpu.memory_space<vmem>>, %arg12: memref<128x32xf32, #tpu.memory_space<vmem>>, %arg13: memref<1x32xf32, #tpu.memory_space<vmem>>, %arg14: memref<16x32xf32, #tpu.memory_space<vmem>>, %arg15: memref<2x16x32xf32, #tpu.memory_space<vmem>>) attributes {dimension_semantics = [], scalar_prefetch = 0 : i64, scratch_operands = 0 : i64, tpu.core_type = #tpu.core_type<tc>} {
    %c0 = arith.constant 0 : index
    %c0_0 = arith.constant 0 : index
    %0 = vector.load %arg0[%c0, %c0_0] : memref<16x32xf32, #tpu.memory_space<vmem>>, vector<16x32xf32>
    %c0_1 = arith.constant 0 : index
    %c0_2 = arith.constant 0 : index
    %c0_3 = arith.constant 0 : index
    %1 = vector.load %arg1[%c0_1, %c0_2, %c0_3] : memref<2x8x8xf32, #tpu.memory_space<vmem>>, vector<2x8x8xf32>
    %c0_4 = arith.constant 0 : index
    %c0_5 = arith.constant 0 : index
    %2 = vector.load %arg2[%c0_4, %c0_5] : memref<1x32xf32, #tpu.memory_space<vmem>>, vector<1x32xf32>
    %c0_6 = arith.constant 0 : index
    %c0_7 = arith.constant 0 : index
    %3 = vector.load %arg3[%c0_6, %c0_7] : memref<1x32xf32, #tpu.memory_space<vmem>>, vector<1x32xf32>
    %cst = arith.constant dense<0.000000e+00> : vector<16xf32>
    %4 = vector.multi_reduction <add>, %0, %cst [1] : vector<16x32xf32> to vector<16xf32>
    %5 = vector.shape_cast %4 : vector<16xf32> to vector<16x1xf32>
    %cst_8 = arith.constant 3.200000e+01 : f32
    %6 = vector.broadcast %cst_8 : f32 to vector<16x1xf32>
    %7 = arith.divf %5, %6 : vector<16x1xf32>
    %8 = vector.broadcast %7 : vector<16x1xf32> to vector<16x32xf32>
    %9 = arith.subf %0, %8 : vector<16x32xf32>
    %10 = arith.mulf %9, %9 : vector<16x32xf32>
    %cst_9 = arith.constant dense<0.000000e+00> : vector<16xf32>
    %11 = vector.multi_reduction <add>, %10, %cst_9 [1] : vector<16x32xf32> to vector<16xf32>
    %12 = vector.shape_cast %11 : vector<16xf32> to vector<16x1xf32>
    %cst_10 = arith.constant 3.200000e+01 : f32
    %13 = vector.broadcast %cst_10 : f32 to vector<16x1xf32>
    %14 = arith.divf %12, %13 : vector<16x1xf32>
    %15 = vector.broadcast %7 : vector<16x1xf32> to vector<16x32xf32>
    %16 = arith.subf %0, %15 : vector<16x32xf32>
    %cst_11 = arith.constant 9.99999974E-6 : f32
    %17 = vector.broadcast %cst_11 : f32 to vector<16x1xf32>
    %18 = arith.addf %14, %17 : vector<16x1xf32>
    %19 = math.rsqrt %18 : vector<16x1xf32>
    %20 = vector.broadcast %19 : vector<16x1xf32> to vector<16x32xf32>
    %21 = arith.mulf %16, %20 : vector<16x32xf32>
    %22 = vector.broadcast %2 : vector<1x32xf32> to vector<16x32xf32>
    %23 = arith.mulf %21, %22 : vector<16x32xf32>
    %24 = vector.broadcast %3 : vector<1x32xf32> to vector<16x32xf32>
    %25 = arith.addf %23, %24 : vector<16x32xf32>
    %c0_12 = arith.constant 0 : index
    %c0_13 = arith.constant 0 : index
    %26 = vector.load %arg4[%c0_12, %c0_13] : memref<32x96xf32, #tpu.memory_space<vmem>>, vector<32x96xf32>
    %cst_14 = arith.constant dense<0.000000e+00> : vector<16x96xf32>
    %27 = tpu.matmul %25, %26, %cst_14 {dimension_numbers = #tpu.dot_dimension_numbers<[1], [0], [0], [1], [0, 0, 1, 1], [], []>} : vector<16x32xf32>, vector<32x96xf32>, vector<16x96xf32> -> vector<16x96xf32>
    %c0_15 = arith.constant 0 : index
    %c0_16 = arith.constant 0 : index
    %28 = vector.load %arg5[%c0_15, %c0_16] : memref<1x96xf32, #tpu.memory_space<vmem>>, vector<1x96xf32>
    %29 = vector.broadcast %28 : vector<1x96xf32> to vector<16x96xf32>
    %30 = arith.addf %27, %29 : vector<16x96xf32>
    %31 = vector.extract_strided_slice %30 {offsets = [0, 32], sizes = [16, 32], strides = [1, 1]} : vector<16x96xf32> to vector<16x32xf32>
    %c0_17 = arith.constant 0 : index
    %c0_18 = arith.constant 0 : index
    %c0_19 = arith.constant 0 : index
    %32 = vector.load %arg15[%c0_17, %c0_18, %c0_19] : memref<2x16x32xf32, #tpu.memory_space<vmem>>, vector<1x16x32xf32>
    %33 = vector.shape_cast %32 : vector<1x16x32xf32> to vector<16x32xf32>
    %34 = vector.shape_cast %31 : vector<16x32xf32> to vector<1x16x32xf32>
    tpu.vector_store %arg15[%c0_17, %c0_18, %c0_19], %34 {strides = array<i32>} : memref<2x16x32xf32, #tpu.memory_space<vmem>>, vector<1x16x32xf32>,
    %35 = vector.extract_strided_slice %30 {offsets = [0, 64], sizes = [16, 32], strides = [1, 1]} : vector<16x96xf32> to vector<16x32xf32>
    %c1 = arith.constant 1 : index
    %c0_20 = arith.constant 0 : index
    %c0_21 = arith.constant 0 : index
    %36 = vector.load %arg15[%c1, %c0_20, %c0_21] : memref<2x16x32xf32, #tpu.memory_space<vmem>>, vector<1x16x32xf32>
    %37 = vector.shape_cast %36 : vector<1x16x32xf32> to vector<16x32xf32>
    %38 = vector.shape_cast %35 : vector<16x32xf32> to vector<1x16x32xf32>
    tpu.vector_store %arg15[%c1, %c0_20, %c0_21], %38 {strides = array<i32>} : memref<2x16x32xf32, #tpu.memory_space<vmem>>, vector<1x16x32xf32>,
    %39 = vector.extract_strided_slice %30 {offsets = [0, 0], sizes = [16, 8], strides = [1, 1]} : vector<16x96xf32> to vector<16x8xf32>
    %40 = vector.shape_cast %39 : vector<16x8xf32> to vector<2x8x8xf32>
    %41 = vector.extract_strided_slice %30 {offsets = [0, 32], sizes = [16, 8], strides = [1, 1]} : vector<16x96xf32> to vector<16x8xf32>
    %42 = vector.shape_cast %41 : vector<16x8xf32> to vector<2x8x8xf32>
    %43 = vector.extract_strided_slice %30 {offsets = [0, 64], sizes = [16, 8], strides = [1, 1]} : vector<16x96xf32> to vector<16x8xf32>
    %44 = vector.shape_cast %43 : vector<16x8xf32> to vector<2x8x8xf32>
    "tpu.trace_start"() <{level = 10 : i32, message = "bqd,bkd->bqk"}> : () -> ()
    %cst_22 = arith.constant dense<0.000000e+00> : vector<2x8x8xf32>
    %45 = tpu.matmul %40, %42, %cst_22 {dimension_numbers = #tpu.dot_dimension_numbers<[2], [2], [1], [1], [0, 0, 0, 1, 1, 1], [0], [0]>} : vector<2x8x8xf32>, vector<2x8x8xf32>, vector<2x8x8xf32> -> vector<2x8x8xf32>
    "tpu.trace_stop"() : () -> ()
    %cst_23 = arith.constant 0.353553385 : f32
    %46 = vector.broadcast %cst_23 : f32 to vector<2x8x8xf32>
    %47 = arith.mulf %45, %46 : vector<2x8x8xf32>
    %48 = arith.addf %47, %1 : vector<2x8x8xf32>
    %cst_24 = arith.constant dense<0xFF800000> : vector<2x8xf32>
    %49 = vector.multi_reduction <maximumf>, %48, %cst_24 [2] : vector<2x8x8xf32> to vector<2x8xf32>
    %50 = vector.shape_cast %49 : vector<2x8xf32> to vector<2x8x1xf32>
    %51 = vector.broadcast %50 : vector<2x8x1xf32> to vector<2x8x8xf32>
    %52 = arith.subf %48, %51 : vector<2x8x8xf32>
    %53 = math.exp %52 : vector<2x8x8xf32>
    %cst_25 = arith.constant dense<0.000000e+00> : vector<2x8xf32>
    %54 = vector.multi_reduction <add>, %53, %cst_25 [2] : vector<2x8x8xf32> to vector<2x8xf32>
    %55 = vector.shape_cast %54 : vector<2x8xf32> to vector<2x8x1xf32>
    %56 = tpu.reciprocal %55 {approx = true} : vector<2x8x1xf32> -> vector<2x8x1xf32>
    %57 = vector.broadcast %56 : vector<2x8x1xf32> to vector<2x8x8xf32>
    %58 = arith.mulf %53, %57 : vector<2x8x8xf32>
    "tpu.trace_start"() <{level = 10 : i32, message = "bqk,bkd->bqd"}> : () -> ()
    %cst_26 = arith.constant dense<0.000000e+00> : vector<2x8x8xf32>
    %59 = tpu.matmul %58, %44, %cst_26 {dimension_numbers = #tpu.dot_dimension_numbers<[2], [1], [1], [2], [0, 0, 0, 1, 1, 2], [0], [0]>} : vector<2x8x8xf32>, vector<2x8x8xf32>, vector<2x8x8xf32> -> vector<2x8x8xf32>
    "tpu.trace_stop"() : () -> ()
    %60 = vector.shape_cast %59 : vector<2x8x8xf32> to vector<16x8xf32>
    %61 = vector.extract_strided_slice %30 {offsets = [0, 8], sizes = [16, 8], strides = [1, 1]} : vector<16x96xf32> to vector<16x8xf32>
    %62 = vector.shape_cast %61 : vector<16x8xf32> to vector<2x8x8xf32>
    %63 = vector.extract_strided_slice %30 {offsets = [0, 40], sizes = [16, 8], strides = [1, 1]} : vector<16x96xf32> to vector<16x8xf32>
    %64 = vector.shape_cast %63 : vector<16x8xf32> to vector<2x8x8xf32>
    %65 = vector.extract_strided_slice %30 {offsets = [0, 72], sizes = [16, 8], strides = [1, 1]} : vector<16x96xf32> to vector<16x8xf32>
    %66 = vector.shape_cast %65 : vector<16x8xf32> to vector<2x8x8xf32>
    "tpu.trace_start"() <{level = 10 : i32, message = "bqd,bkd->bqk"}> : () -> ()
    %cst_27 = arith.constant dense<0.000000e+00> : vector<2x8x8xf32>
    %67 = tpu.matmul %62, %64, %cst_27 {dimension_numbers = #tpu.dot_dimension_numbers<[2], [2], [1], [1], [0, 0, 0, 1, 1, 1], [0], [0]>} : vector<2x8x8xf32>, vector<2x8x8xf32>, vector<2x8x8xf32> -> vector<2x8x8xf32>
    "tpu.trace_stop"() : () -> ()
    %cst_28 = arith.constant 0.353553385 : f32
    %68 = vector.broadcast %cst_28 : f32 to vector<2x8x8xf32>
    %69 = arith.mulf %67, %68 : vector<2x8x8xf32>
    %70 = arith.addf %69, %1 : vector<2x8x8xf32>
    %cst_29 = arith.constant dense<0xFF800000> : vector<2x8xf32>
    %71 = vector.multi_reduction <maximumf>, %70, %cst_29 [2] : vector<2x8x8xf32> to vector<2x8xf32>
    %72 = vector.shape_cast %71 : vector<2x8xf32> to vector<2x8x1xf32>
    %73 = vector.broadcast %72 : vector<2x8x1xf32> to vector<2x8x8xf32>
    %74 = arith.subf %70, %73 : vector<2x8x8xf32>
    %75 = math.exp %74 : vector<2x8x8xf32>
    %cst_30 = arith.constant dense<0.000000e+00> : vector<2x8xf32>
    %76 = vector.multi_reduction <add>, %75, %cst_30 [2] : vector<2x8x8xf32> to vector<2x8xf32>
    %77 = vector.shape_cast %76 : vector<2x8xf32> to vector<2x8x1xf32>
    %78 = tpu.reciprocal %77 {approx = true} : vector<2x8x1xf32> -> vector<2x8x1xf32>
    %79 = vector.broadcast %78 : vector<2x8x1xf32> to vector<2x8x8xf32>
    %80 = arith.mulf %75, %79 : vector<2x8x8xf32>
    "tpu.trace_start"() <{level = 10 : i32, message = "bqk,bkd->bqd"}> : () -> ()
    %cst_31 = arith.constant dense<0.000000e+00> : vector<2x8x8xf32>
    %81 = tpu.matmul %80, %66, %cst_31 {dimension_numbers = #tpu.dot_dimension_numbers<[2], [1], [1], [2], [0, 0, 0, 1, 1, 2], [0], [0]>} : vector<2x8x8xf32>, vector<2x8x8xf32>, vector<2x8x8xf32> -> vector<2x8x8xf32>
    "tpu.trace_stop"() : () -> ()
    %82 = vector.shape_cast %81 : vector<2x8x8xf32> to vector<16x8xf32>
    %83 = vector.extract_strided_slice %30 {offsets = [0, 16], sizes = [16, 8], strides = [1, 1]} : vector<16x96xf32> to vector<16x8xf32>
    %84 = vector.shape_cast %83 : vector<16x8xf32> to vector<2x8x8xf32>
    %85 = vector.extract_strided_slice %30 {offsets = [0, 48], sizes = [16, 8], strides = [1, 1]} : vector<16x96xf32> to vector<16x8xf32>
    %86 = vector.shape_cast %85 : vector<16x8xf32> to vector<2x8x8xf32>
    %87 = vector.extract_strided_slice %30 {offsets = [0, 80], sizes = [16, 8], strides = [1, 1]} : vector<16x96xf32> to vector<16x8xf32>
    %88 = vector.shape_cast %87 : vector<16x8xf32> to vector<2x8x8xf32>
    "tpu.trace_start"() <{level = 10 : i32, message = "bqd,bkd->bqk"}> : () -> ()
    %cst_32 = arith.constant dense<0.000000e+00> : vector<2x8x8xf32>
    %89 = tpu.matmul %84, %86, %cst_32 {dimension_numbers = #tpu.dot_dimension_numbers<[2], [2], [1], [1], [0, 0, 0, 1, 1, 1], [0], [0]>} : vector<2x8x8xf32>, vector<2x8x8xf32>, vector<2x8x8xf32> -> vector<2x8x8xf32>
    "tpu.trace_stop"() : () -> ()
    %cst_33 = arith.constant 0.353553385 : f32
    %90 = vector.broadcast %cst_33 : f32 to vector<2x8x8xf32>
    %91 = arith.mulf %89, %90 : vector<2x8x8xf32>
    %92 = arith.addf %91, %1 : vector<2x8x8xf32>
    %cst_34 = arith.constant dense<0xFF800000> : vector<2x8xf32>
    %93 = vector.multi_reduction <maximumf>, %92, %cst_34 [2] : vector<2x8x8xf32> to vector<2x8xf32>
    %94 = vector.shape_cast %93 : vector<2x8xf32> to vector<2x8x1xf32>
    %95 = vector.broadcast %94 : vector<2x8x1xf32> to vector<2x8x8xf32>
    %96 = arith.subf %92, %95 : vector<2x8x8xf32>
    %97 = math.exp %96 : vector<2x8x8xf32>
    %cst_35 = arith.constant dense<0.000000e+00> : vector<2x8xf32>
    %98 = vector.multi_reduction <add>, %97, %cst_35 [2] : vector<2x8x8xf32> to vector<2x8xf32>
    %99 = vector.shape_cast %98 : vector<2x8xf32> to vector<2x8x1xf32>
    %100 = tpu.reciprocal %99 {approx = true} : vector<2x8x1xf32> -> vector<2x8x1xf32>
    %101 = vector.broadcast %100 : vector<2x8x1xf32> to vector<2x8x8xf32>
    %102 = arith.mulf %97, %101 : vector<2x8x8xf32>
    "tpu.trace_start"() <{level = 10 : i32, message = "bqk,bkd->bqd"}> : () -> ()
    %cst_36 = arith.constant dense<0.000000e+00> : vector<2x8x8xf32>
    %103 = tpu.matmul %102, %88, %cst_36 {dimension_numbers = #tpu.dot_dimension_numbers<[2], [1], [1], [2], [0, 0, 0, 1, 1, 2], [0], [0]>} : vector<2x8x8xf32>, vector<2x8x8xf32>, vector<2x8x8xf32> -> vector<2x8x8xf32>
    "tpu.trace_stop"() : () -> ()
    %104 = vector.shape_cast %103 : vector<2x8x8xf32> to vector<16x8xf32>
    %105 = vector.extract_strided_slice %30 {offsets = [0, 24], sizes = [16, 8], strides = [1, 1]} : vector<16x96xf32> to vector<16x8xf32>
    %106 = vector.shape_cast %105 : vector<16x8xf32> to vector<2x8x8xf32>
    %107 = vector.extract_strided_slice %30 {offsets = [0, 56], sizes = [16, 8], strides = [1, 1]} : vector<16x96xf32> to vector<16x8xf32>
    %108 = vector.shape_cast %107 : vector<16x8xf32> to vector<2x8x8xf32>
    %109 = vector.extract_strided_slice %30 {offsets = [0, 88], sizes = [16, 8], strides = [1, 1]} : vector<16x96xf32> to vector<16x8xf32>
    %110 = vector.shape_cast %109 : vector<16x8xf32> to vector<2x8x8xf32>
    "tpu.trace_start"() <{level = 10 : i32, message = "bqd,bkd->bqk"}> : () -> ()
    %cst_37 = arith.constant dense<0.000000e+00> : vector<2x8x8xf32>
    %111 = tpu.matmul %106, %108, %cst_37 {dimension_numbers = #tpu.dot_dimension_numbers<[2], [2], [1], [1], [0, 0, 0, 1, 1, 1], [0], [0]>} : vector<2x8x8xf32>, vector<2x8x8xf32>, vector<2x8x8xf32> -> vector<2x8x8xf32>
    "tpu.trace_stop"() : () -> ()
    %cst_38 = arith.constant 0.353553385 : f32
    %112 = vector.broadcast %cst_38 : f32 to vector<2x8x8xf32>
    %113 = arith.mulf %111, %112 : vector<2x8x8xf32>
    %114 = arith.addf %113, %1 : vector<2x8x8xf32>
    %cst_39 = arith.constant dense<0xFF800000> : vector<2x8xf32>
    %115 = vector.multi_reduction <maximumf>, %114, %cst_39 [2] : vector<2x8x8xf32> to vector<2x8xf32>
    %116 = vector.shape_cast %115 : vector<2x8xf32> to vector<2x8x1xf32>
    %117 = vector.broadcast %116 : vector<2x8x1xf32> to vector<2x8x8xf32>
    %118 = arith.subf %114, %117 : vector<2x8x8xf32>
    %119 = math.exp %118 : vector<2x8x8xf32>
    %cst_40 = arith.constant dense<0.000000e+00> : vector<2x8xf32>
    %120 = vector.multi_reduction <add>, %119, %cst_40 [2] : vector<2x8x8xf32> to vector<2x8xf32>
    %121 = vector.shape_cast %120 : vector<2x8xf32> to vector<2x8x1xf32>
    %122 = tpu.reciprocal %121 {approx = true} : vector<2x8x1xf32> -> vector<2x8x1xf32>
    %123 = vector.broadcast %122 : vector<2x8x1xf32> to vector<2x8x8xf32>
    %124 = arith.mulf %119, %123 : vector<2x8x8xf32>
    "tpu.trace_start"() <{level = 10 : i32, message = "bqk,bkd->bqd"}> : () -> ()
    %cst_41 = arith.constant dense<0.000000e+00> : vector<2x8x8xf32>
    %125 = tpu.matmul %124, %110, %cst_41 {dimension_numbers = #tpu.dot_dimension_numbers<[2], [1], [1], [2], [0, 0, 0, 1, 1, 2], [0], [0]>} : vector<2x8x8xf32>, vector<2x8x8xf32>, vector<2x8x8xf32> -> vector<2x8x8xf32>
    "tpu.trace_stop"() : () -> ()
    %126 = vector.shape_cast %125 : vector<2x8x8xf32> to vector<16x8xf32>
    %127 = tpu.concatenate %60, %82, %104, %126 in 1 : vector<16x8xf32>, vector<16x8xf32>, vector<16x8xf32>, vector<16x8xf32> -> vector<16x32xf32>
    %c0_42 = arith.constant 0 : index
    %c0_43 = arith.constant 0 : index
    %128 = vector.load %arg6[%c0_42, %c0_43] : memref<32x32xf32, #tpu.memory_space<vmem>>, vector<32x32xf32>
    %cst_44 = arith.constant dense<0.000000e+00> : vector<16x32xf32>
    %129 = tpu.matmul %127, %128, %cst_44 {dimension_numbers = #tpu.dot_dimension_numbers<[1], [0], [0], [1], [0, 0, 1, 1], [], []>} : vector<16x32xf32>, vector<32x32xf32>, vector<16x32xf32> -> vector<16x32xf32>
    %c0_45 = arith.constant 0 : index
    %c0_46 = arith.constant 0 : index
    %130 = vector.load %arg7[%c0_45, %c0_46] : memref<1x32xf32, #tpu.memory_space<vmem>>, vector<1x32xf32>
    %131 = vector.broadcast %130 : vector<1x32xf32> to vector<16x32xf32>
    %132 = arith.addf %129, %131 : vector<16x32xf32>
    %133 = arith.addf %0, %132 : vector<16x32xf32>
    %c0_47 = arith.constant 0 : index
    %c0_48 = arith.constant 0 : index
    %134 = vector.load %arg8[%c0_47, %c0_48] : memref<1x32xf32, #tpu.memory_space<vmem>>, vector<1x32xf32>
    %c0_49 = arith.constant 0 : index
    %c0_50 = arith.constant 0 : index
    %135 = vector.load %arg9[%c0_49, %c0_50] : memref<1x32xf32, #tpu.memory_space<vmem>>, vector<1x32xf32>
    %cst_51 = arith.constant dense<0.000000e+00> : vector<16xf32>
    %136 = vector.multi_reduction <add>, %133, %cst_51 [1] : vector<16x32xf32> to vector<16xf32>
    %137 = vector.shape_cast %136 : vector<16xf32> to vector<16x1xf32>
    %cst_52 = arith.constant 3.200000e+01 : f32
    %138 = vector.broadcast %cst_52 : f32 to vector<16x1xf32>
    %139 = arith.divf %137, %138 : vector<16x1xf32>
    %140 = vector.broadcast %139 : vector<16x1xf32> to vector<16x32xf32>
    %141 = arith.subf %133, %140 : vector<16x32xf32>
    %142 = arith.mulf %141, %141 : vector<16x32xf32>
    %cst_53 = arith.constant dense<0.000000e+00> : vector<16xf32>
    %143 = vector.multi_reduction <add>, %142, %cst_53 [1] : vector<16x32xf32> to vector<16xf32>
    %144 = vector.shape_cast %143 : vector<16xf32> to vector<16x1xf32>
    %cst_54 = arith.constant 3.200000e+01 : f32
    %145 = vector.broadcast %cst_54 : f32 to vector<16x1xf32>
    %146 = arith.divf %144, %145 : vector<16x1xf32>
    %147 = vector.broadcast %139 : vector<16x1xf32> to vector<16x32xf32>
    %148 = arith.subf %133, %147 : vector<16x32xf32>
    %cst_55 = arith.constant 9.99999974E-6 : f32
    %149 = vector.broadcast %cst_55 : f32 to vector<16x1xf32>
    %150 = arith.addf %146, %149 : vector<16x1xf32>
    %151 = math.rsqrt %150 : vector<16x1xf32>
    %152 = vector.broadcast %151 : vector<16x1xf32> to vector<16x32xf32>
    %153 = arith.mulf %148, %152 : vector<16x32xf32>
    %154 = vector.broadcast %134 : vector<1x32xf32> to vector<16x32xf32>
    %155 = arith.mulf %153, %154 : vector<16x32xf32>
    %156 = vector.broadcast %135 : vector<1x32xf32> to vector<16x32xf32>
    %157 = arith.addf %155, %156 : vector<16x32xf32>
    %c0_56 = arith.constant 0 : index
    %c0_57 = arith.constant 0 : index
    %158 = vector.load %arg10[%c0_56, %c0_57] : memref<32x128xf32, #tpu.memory_space<vmem>>, vector<32x128xf32>
    %cst_58 = arith.constant dense<0.000000e+00> : vector<16x128xf32>
    %159 = tpu.matmul %157, %158, %cst_58 {dimension_numbers = #tpu.dot_dimension_numbers<[1], [0], [0], [1], [0, 0, 1, 1], [], []>} : vector<16x32xf32>, vector<32x128xf32>, vector<16x128xf32> -> vector<16x128xf32>
    %c0_59 = arith.constant 0 : index
    %c0_60 = arith.constant 0 : index
    %160 = vector.load %arg11[%c0_59, %c0_60] : memref<1x128xf32, #tpu.memory_space<vmem>>, vector<1x128xf32>
    %161 = vector.broadcast %160 : vector<1x128xf32> to vector<16x128xf32>
    %162 = arith.addf %159, %161 : vector<16x128xf32>
    %cst_61 = arith.constant 5.000000e-01 : f32
    %163 = vector.broadcast %cst_61 : f32 to vector<16x128xf32>
    %164 = arith.mulf %163, %162 : vector<16x128xf32>
    %cst_62 = arith.constant 4.471500e-02 : f32
    %165 = vector.broadcast %cst_62 : f32 to vector<16x128xf32>
    %166 = arith.mulf %165, %162 : vector<16x128xf32>
    %167 = arith.mulf %166, %162 : vector<16x128xf32>
    %168 = arith.mulf %167, %162 : vector<16x128xf32>
    %169 = arith.addf %162, %168 : vector<16x128xf32>
    %cst_63 = arith.constant 0.797884583 : f32
    %170 = vector.broadcast %cst_63 : f32 to vector<16x128xf32>
    %171 = arith.mulf %170, %169 : vector<16x128xf32>
    %172 = math.tanh %171 : vector<16x128xf32>
    %cst_64 = arith.constant 1.000000e+00 : f32
    %173 = vector.broadcast %cst_64 : f32 to vector<16x128xf32>
    %174 = arith.addf %173, %172 : vector<16x128xf32>
    %175 = arith.mulf %164, %174 : vector<16x128xf32>
    %c0_65 = arith.constant 0 : index
    %c0_66 = arith.constant 0 : index
    %176 = vector.load %arg12[%c0_65, %c0_66] : memref<128x32xf32, #tpu.memory_space<vmem>>, vector<128x32xf32>
    %cst_67 = arith.constant dense<0.000000e+00> : vector<16x32xf32>
    %177 = tpu.matmul %175, %176, %cst_67 {dimension_numbers = #tpu.dot_dimension_numbers<[1], [0], [0], [1], [0, 0, 1, 1], [], []>} : vector<16x128xf32>, vector<128x32xf32>, vector<16x32xf32> -> vector<16x32xf32>
    %c0_68 = arith.constant 0 : index
    %c0_69 = arith.constant 0 : index
    %178 = vector.load %arg13[%c0_68, %c0_69] : memref<1x32xf32, #tpu.memory_space<vmem>>, vector<1x32xf32>
    %179 = vector.broadcast %178 : vector<1x32xf32> to vector<16x32xf32>
    %180 = arith.addf %177, %179 : vector<16x32xf32>
    %181 = arith.addf %133, %180 : vector<16x32xf32>
    %c0_70 = arith.constant 0 : index
    %c0_71 = arith.constant 0 : index
    %182 = vector.load %arg14[%c0_70, %c0_71] : memref<16x32xf32, #tpu.memory_space<vmem>>, vector<16x32xf32>
    tpu.vector_store %arg14[%c0_70, %c0_71], %181 {strides = array<i32>} : memref<16x32xf32, #tpu.memory_space<vmem>>, vector<16x32xf32>,
    return
  }
}

</mosaic_0001>

<llo_original>
// kernel: tpu_custom_call.1
$region0: #{tpu_custom_call.1}
  #allocation0 [shape = 'u32[]', space=smem, size = 0x4, offset = 0x4, fixed_abs, tag = 'smem constant byte address 0x4 - core index']
  #allocation1 [shape = 'u32[144,128]{1,0:T(1,128)}', space=vmem, size = 0x12000, scoped, tag = 'internal scratch']
  %s0 = inlined_call_operand.vmem [shape: f32[16,32], index: 0, kind: input, shape index: {}]
  %s1 = inlined_call_operand.vmem [shape: f32[2,8,8], index: 1, kind: input, shape index: {}]
  %s2 = inlined_call_operand.vmem [shape: f32[1,32], index: 2, kind: input, shape index: {}]
  %s3 = inlined_call_operand.vmem [shape: f32[1,32], index: 3, kind: input, shape index: {}]
  %s4 = inlined_call_operand.vmem [shape: f32[32,96], index: 4, kind: input, shape index: {}]
  %s5 = inlined_call_operand.vmem [shape: f32[1,96], index: 5, kind: input, shape index: {}]
  %s6 = inlined_call_operand.vmem [shape: f32[32,32], index: 6, kind: input, shape index: {}]
  %s7 = inlined_call_operand.vmem [shape: f32[1,32], index: 7, kind: input, shape index: {}]
  %s8 = inlined_call_operand.vmem [shape: f32[1,32], index: 8, kind: input, shape index: {}]
  %s9 = inlined_call_operand.vmem [shape: f32[1,32], index: 9, kind: input, shape index: {}]
  %s10 = inlined_call_operand.vmem [shape: f32[32,128], index: 10, kind: input, shape index: {}]
  %s11 = inlined_call_operand.vmem [shape: f32[1,128], index: 11, kind: input, shape index: {}]
  %s12 = inlined_call_operand.vmem [shape: f32[128,32], index: 12, kind: input, shape index: {}]
  %s13 = inlined_call_operand.vmem [shape: f32[1,32], index: 13, kind: input, shape index: {}]
  %s14 = inlined_call_operand.hbm [shape: f32[16,32], index: 14, kind: output, shape index: {0}]
  %s15 = inlined_call_operand.hbm [shape: f32[2,16,32], index: 15, kind: output, shape index: {1}]
  %16 = xla_tuple %s14, %s15
  %s17 = sld [smem:[#allocation0]]
  $region74: #{tpu_custom_call.1} parent=0
    _
  %s19 = ssub.s32 1, %s17
  %s20 = scalar_select 0, %s19, %s17
  $region1: #{tpu_custom_call.1} parent=0
    #allocation2 [shape = 'u8[8192]{0}', space=vmem, size = 0x2000, scoped, tag = 'output window, operand 0, single buffered']
    #allocation3 [shape = 's32[1]{0}', space=sflag, size = 0x4, scoped, tag = 'scoped memory for tpu_custom_call.1']
    #allocation4 [shape = 'u8[16384]{0}', space=vmem, size = 0x4000, scoped, tag = 'output window, operand 1, single buffered']
    #allocation5 [shape = 's32[1]{0}', space=sflag, size = 0x4, scoped, tag = 'scoped memory for tpu_custom_call.1']
    %21 = vsyncpa [#allocation3], 0
    %22 = vsyncpa [#allocation5], 0
    // Predicated region
    $region2: #{tpu_custom_call.1} parent=1 // pred_check
      _
    $region3: #{tpu_custom_call.1} parent=1 // pred_check_branch
      %24 = sbr.rel (0) target = $region5
    $region4: #{tpu_custom_call.1} parent=1 // pred_region
      _
    $region5: #{tpu_custom_call.1} parent=1 // pred_fallthru
      _
    // Predicated region
    $region6: #{tpu_custom_call.1} parent=1 // pred_check
      _
    $region7: #{tpu_custom_call.1} parent=1 // pred_check_branch
      %26 = sbr.rel (0) target = $region9
    $region8: #{tpu_custom_call.1} parent=1 // pred_region
      _
    $region9: #{tpu_custom_call.1} parent=1 // pred_fallthru
      _
    // Predicated region
    $region10: #{tpu_custom_call.1} parent=1 // pred_check
      _
    $region11: #{tpu_custom_call.1} parent=1 // pred_check_branch
      %28 = sbr.rel (0) target = $region13
    $region12: #{tpu_custom_call.1} parent=1 // pred_region
      _
    $region13: #{tpu_custom_call.1} parent=1 // pred_fallthru
      _
    // Predicated region
    $region14: #{tpu_custom_call.1} parent=1 // pred_check
      _
    $region15: #{tpu_custom_call.1} parent=1 // pred_check_branch
      %30 = sbr.rel (0) target = $region17
    $region16: #{tpu_custom_call.1} parent=1 // pred_region
      _
    $region17: #{tpu_custom_call.1} parent=1 // pred_fallthru
      _
    // Predicated region
    $region18: #{tpu_custom_call.1} parent=1 // pred_check
      _
    $region19: #{tpu_custom_call.1} parent=1 // pred_check_branch
      %32 = sbr.rel (0) target = $region21
    $region20: #{tpu_custom_call.1} parent=1 // pred_region
      _
    $region21: #{tpu_custom_call.1} parent=1 // pred_fallthru
      _
    // Predicated region
    $region22: #{tpu_custom_call.1} parent=1 // pred_check
      _
    $region23: #{tpu_custom_call.1} parent=1 // pred_check_branch
      %34 = sbr.rel (0) target = $region25
    $region24: #{tpu_custom_call.1} parent=1 // pred_region
      _
    $region25: #{tpu_custom_call.1} parent=1 // pred_fallthru
      _
    // Predicated region
    $region26: #{tpu_custom_call.1} parent=1 // pred_check
      _
    $region27: #{tpu_custom_call.1} parent=1 // pred_check_branch
      %36 = sbr.rel (0) target = $region29
    $region28: #{tpu_custom_call.1} parent=1 // pred_region
      _
    $region29: #{tpu_custom_call.1} parent=1 // pred_fallthru
      _
    // Predicated region
    $region30: #{tpu_custom_call.1} parent=1 // pred_check
      _
    $region31: #{tpu_custom_call.1} parent=1 // pred_check_branch
      %38 = sbr.rel (0) target = $region33
    $region32: #{tpu_custom_call.1} parent=1 // pred_region
      _
    $region33: #{tpu_custom_call.1} parent=1 // pred_fallthru
      _
    // Predicated region
    $region34: #{tpu_custom_call.1} parent=1 // pred_check
      _
    $region35: #{tpu_custom_call.1} parent=1 // pred_check_branch
      %40 = sbr.rel (0) target = $region37
    $region36: #{tpu_custom_call.1} parent=1 // pred_region
      _
    $region37: #{tpu_custom_call.1} parent=1 // pred_fallthru
      _
    // Predicated region
    $region38: #{tpu_custom_call.1} parent=1 // pred_check
      _
    $region39: #{tpu_custom_call.1} parent=1 // pred_check_branch
      %42 = sbr.rel (0) target = $region41
    $region40: #{tpu_custom_call.1} parent=1 // pred_region
      _
    $region41: #{tpu_custom_call.1} parent=1 // pred_fallthru
      _
    // Predicated region
    $region42: #{tpu_custom_call.1} parent=1 // pred_check
      _
    $region43: #{tpu_custom_call.1} parent=1 // pred_check_branch
      %44 = sbr.rel (0) target = $region45
    $region44: #{tpu_custom_call.1} parent=1 // pred_region
      _
    $region45: #{tpu_custom_call.1} parent=1 // pred_fallthru
      _
    // Predicated region
    $region46: #{tpu_custom_call.1} parent=1 // pred_check
      _
    $region47: #{tpu_custom_call.1} parent=1 // pred_check_branch
      %46 = sbr.rel (0) target = $region49
    $region48: #{tpu_custom_call.1} parent=1 // pred_region
      _
    $region49: #{tpu_custom_call.1} parent=1 // pred_fallthru
      _
    // Predicated region
    $region50: #{tpu_custom_call.1} parent=1 // pred_check
      _
    $region51: #{tpu_custom_call.1} parent=1 // pred_check_branch
      %48 = sbr.rel (0) target = $region53
    $region52: #{tpu_custom_call.1} parent=1 // pred_region
      _
    $region53: #{tpu_custom_call.1} parent=1 // pred_fallthru
      _
    // Predicated region
    $region54: #{tpu_custom_call.1} parent=1 // pred_check
      _
    $region55: #{tpu_custom_call.1} parent=1 // pred_check_branch
      %50 = sbr.rel (0) target = $region57
    $region56: #{tpu_custom_call.1} parent=1 // pred_region
      _
    $region57: #{tpu_custom_call.1} parent=1 // pred_fallthru
      _
    %v51 = vld [vmem:[%s0] sm:$0xff]
    %v52 = vld [vmem:[%s0 + $0x8] sm:$0xff]
    %v53 = vld [vmem:[%s1] sm:$0xff]
    %v54 = vld [vmem:[%s1 + $0x8] sm:$0xff]
    %v55 = vld [vmem:[%s2] sm:$0x1]
    %v56 = vld [vmem:[%s3] sm:$0x1]
    %vm57 = vcmask 261120
    %v58 = vsel %vm57, %v51, 0.0
    %59 = vadd.xlane.f32.xlu0 %v58
    %v60 = vpop.xlane.xlu0 %59
    %v61 = vsel %vm57, %v52, 0.0
    %62 = vadd.xlane.f32.xlu0 %v61
    %v63 = vpop.xlane.xlu0 %62
    %v64 = vrcp.pop 32.0
    %v65 = vmul.f32 %v60, %v64
    %v66 = vmul.f32 %v63, %v64
    %v67 = vsub.f32 %v51, %v65
    %v68 = vsub.f32 %v52, %v66
    %v69 = vmul.f32 %v67, %v67
    %v70 = vmul.f32 %v68, %v68
    %v71 = vsel %vm57, %v69, 0.0
    %72 = vadd.xlane.f32.xlu0 %v71
    %v73 = vpop.xlane.xlu0 %72
    %v74 = vsel %vm57, %v70, 0.0
    %75 = vadd.xlane.f32.xlu0 %v74
    %v76 = vpop.xlane.xlu0 %75
    %v77 = vmul.f32 %v73, %v64
    %v78 = vmul.f32 %v76, %v64
    %v79 = vadd.f32 %v77, 1e-05
    %v80 = vadd.f32 %v78, 1e-05
    %v81 = vrsqrt.pop %v79
    %v82 = vrsqrt.pop %v80
    %v83 = vmul.f32 %v67, %v81
    %v84 = vmul.f32 %v68, %v82
    %v86 = vlaneseq
    %v87 = vshrl.u32 %v86, 7
    %v88 = vsub.s32 0, %v87
    %v89 = vrot.slane %v55, %v88
    %v91 = vmul.f32 %v83, %v89
    %v92 = vmul.f32 %v84, %v89
    %v94 = vlaneseq
    %v95 = vshrl.u32 %v94, 7
    %v96 = vsub.s32 0, %v95
    %v97 = vrot.slane %v56, %v96
    %v99 = vadd.f32 %v91, %v97
    %v100 = vadd.f32 %v92, %v97
    %v101 = vld [vmem:[%s4] sm:$0xff]
    %v102 = vld [vmem:[%s4 + $0x8] sm:$0xff]
    %v103 = vld [vmem:[%s4 + $0x10] sm:$0xff]
    %v104 = vld [vmem:[%s4 + $0x18] sm:$0xff]
    %v105 = vld [vmem:[%s5] sm:$0x1]
    %v107 = vlaneseq
    %v108 = vshrl.u32 %v107, 7
    %v109 = vsub.s32 0, %v108
    %v110 = vrot.slane %v105, %v109
    %v113 = vsel %vm57, %v99, 0
    %v116 = vsel %vm57, %v100, 0
    %118 = vmatprep.subr.mxu0 0.0
    %119 = vmatpush1.msra.mxu0 0.0
    %120 = vmatprep.subr.mxu0 0.0
    %121 = vmatpush1.msra.mxu0 0.0
    %122 = vmatprep.subr.mxu0 0.0
    %123 = vmatpush1.msra.mxu0 0.0
    %124 = vmatprep.subr.mxu0 0.0
    %125 = vmatpush1.msra.mxu0 0.0
    %126 = vmatprep.subr.mxu0 0.0
    %127 = vmatpush1.msra.mxu0 0.0
    %128 = vmatprep.subr.mxu0 0.0
    %129 = vmatpush1.msra.mxu0 0.0
    %130 = vmatprep.subr.mxu0 0.0
    %131 = vmatpush1.msra.mxu0 0.0
    %132 = vmatprep.subr.mxu0 0.0
    %133 = vmatpush1.msra.mxu0 0.0
    %134 = vmatprep.subr.mxu0 0.0
    %135 = vmatpush1.msra.mxu0 0.0
    %136 = vmatprep.subr.mxu0 0.0
    %137 = vmatpush1.msra.mxu0 0.0
    %138 = vmatprep.subr.mxu0 0.0
    %139 = vmatpush1.msra.mxu0 0.0
    %140 = vmatprep.subr.mxu0 0.0
    %141 = vmatpush1.msra.mxu0 0.0
    %142 = vmatprep.subr.mxu0 0.0
    %143 = vmatpush1.msra.mxu0 %v104
    %144 = vmatprep.subr.mxu0 0.0
    %145 = vmatpush1.msra.mxu0 %v103
    %146 = vmatprep.subr.mxu0 0.0
    %147 = vmatpush1.msra.mxu0 %v102
    %148 = vmatprep.subr.mxu0 0.0
    %149 = vmatpush1.msra.mxu0 %v101
    %150 = vmatprep.subr.mxu0 0.0
    %151 = vmatpush2.msra.mxu0 0.0
    %152 = vmatprep.subr.mxu0 0.0
    %153 = vmatpush2.msra.mxu0 0.0
    %154 = vmatprep.subr.mxu0 0.0
    %155 = vmatpush2.msra.mxu0 0.0
    %156 = vmatprep.subr.mxu0 0.0
    %157 = vmatpush2.msra.mxu0 0.0
    %158 = vmatprep.subr.mxu0 0.0
    %159 = vmatpush2.msra.mxu0 0.0
    %160 = vmatprep.subr.mxu0 0.0
    %161 = vmatpush2.msra.mxu0 0.0
    %162 = vmatprep.subr.mxu0 0.0
    %163 = vmatpush2.msra.mxu0 0.0
    %164 = vmatprep.subr.mxu0 0.0
    %165 = vmatpush2.msra.mxu0 0.0
    %166 = vmatprep.subr.mxu0 0.0
    %167 = vmatpush2.msra.mxu0 0.0
    %168 = vmatprep.subr.mxu0 0.0
    %169 = vmatpush2.msra.mxu0 0.0
    %170 = vmatprep.subr.mxu0 0.0
    %171 = vmatpush2.msra.mxu0 0.0
    %172 = vmatprep.subr.mxu0 0.0
    %173 = vmatpush2.msra.mxu0 0.0
    %174 = vmatprep.subr.mxu0 0.0
    %175 = vmatpush2.msra.mxu0 0.0
    %176 = vmatprep.subr.mxu0 0.0
    %177 = vmatpush2.msra.mxu0 0.0
    %178 = vmatprep.subr.mxu0 0.0
    %179 = vmatpush2.msra.mxu0 0.0
    %180 = vmatprep.subr.mxu0 0.0
    %181 = vmatpush2.msra.mxu0 0.0
    %182 = vmatprep.mubr.f32.mxu0 0.0
    %183 = vmatmul.mubr.f32.gmra.mxu0 %v113
    %v184 = vpop.f32.mrf.mxu0
    %v185 = vadd.f32 %v110, %v184
    %v186 = vpop.f32.mrf.mxu0
    %187 = vmatprep.mubr.f32.mxu0 0.0
    %188 = vmatmul.mubr.f32.gmra.mxu0 %v116
    %v189 = vpop.f32.mrf.mxu0
    %v190 = vadd.f32 %v110, %v189
    %v191 = vpop.f32.mrf.mxu0
    %192 = vdwg.mxu0
    %195 = vrot.lane.b32.xlu0 %v185, 96
    %v196 = vpop.permute.xlu0 %195
    %197 = vrot.lane.b32.xlu0 %v190, 96
    %v198 = vpop.permute.xlu0 %197
    %201 = vst.msk [vmem:[#allocation4] sm:$0xff] %vm57, %v196
    %202 = vst.msk [vmem:[#allocation4 + $0x8] sm:$0xff] %vm57, %v198
    %203 = vrot.lane.b32.xlu0 %v185, 64
    %v204 = vpop.permute.xlu0 %203
    %205 = vrot.lane.b32.xlu0 %v190, 64
    %v206 = vpop.permute.xlu0 %205
    %s209 = scalar_lea.vmem [#allocation4], 16
    %210 = vst.msk [vmem:[%s209] sm:$0xff] %vm57, %v204
    %211 = vst.msk [vmem:[%s209 + $0x8] sm:$0xff] %vm57, %v206
    %vm212 = vcmask 64512
    %v213 = vsel %vm212, %v185, 0
    %v215 = vsel %vm212, %v196, 0
    %217 = vmatprep.subr.mxu0 0.0
    %218 = vmatpush1.xpose.msra.mxu0 0.0
    %219 = vmatprep.subr.mxu0 0.0
    %220 = vmatpush1.xpose.msra.mxu0 0.0
    %221 = vmatprep.subr.mxu0 0.0
    %222 = vmatpush1.xpose.msra.mxu0 0.0
    %223 = vmatprep.subr.mxu0 0.0
    %224 = vmatpush1.xpose.msra.mxu0 0.0
    %225 = vmatprep.subr.mxu0 0.0
    %226 = vmatpush1.xpose.msra.mxu0 0.0
    %227 = vmatprep.subr.mxu0 0.0
    %228 = vmatpush1.xpose.msra.mxu0 0.0
    %229 = vmatprep.subr.mxu0 0.0
    %230 = vmatpush1.xpose.msra.mxu0 0.0
    %231 = vmatprep.subr.mxu0 0.0
    %232 = vmatpush1.xpose.msra.mxu0 0.0
    %233 = vmatprep.subr.mxu0 0.0
    %234 = vmatpush1.xpose.msra.mxu0 0.0
    %235 = vmatprep.subr.mxu0 0.0
    %236 = vmatpush1.xpose.msra.mxu0 0.0
    %237 = vmatprep.subr.mxu0 0.0
    %238 = vmatpush1.xpose.msra.mxu0 0.0
    %239 = vmatprep.subr.mxu0 0.0
    %240 = vmatpush1.xpose.msra.mxu0 0.0
    %241 = vmatprep.subr.mxu0 0.0
    %242 = vmatpush1.xpose.msra.mxu0 0.0
    %243 = vmatprep.subr.mxu0 0.0
    %244 = vmatpush1.xpose.msra.mxu0 0.0
    %245 = vmatprep.subr.mxu0 0.0
    %246 = vmatpush1.xpose.msra.mxu0 0.0
    %247 = vmatprep.subr.mxu0 0.0
    %248 = vmatpush1.xpose.msra.mxu0 %v215
    %249 = vmatprep.subr.mxu0 0.0
    %250 = vmatpush2.xpose.msra.mxu0 0.0
    %251 = vmatprep.subr.mxu0 0.0
    %252 = vmatpush2.xpose.msra.mxu0 0.0
    %253 = vmatprep.subr.mxu0 0.0
    %254 = vmatpush2.xpose.msra.mxu0 0.0
    %255 = vmatprep.subr.mxu0 0.0
    %256 = vmatpush2.xpose.msra.mxu0 0.0
    %257 = vmatprep.subr.mxu0 0.0
    %258 = vmatpush2.xpose.msra.mxu0 0.0
    %259 = vmatprep.subr.mxu0 0.0
    %260 = vmatpush2.xpose.msra.mxu0 0.0
    %261 = vmatprep.subr.mxu0 0.0
    %262 = vmatpush2.xpose.msra.mxu0 0.0
    %263 = vmatprep.subr.mxu0 0.0
    %264 = vmatpush2.xpose.msra.mxu0 0.0
    %265 = vmatprep.subr.mxu0 0.0
    %266 = vmatpush2.xpose.msra.mxu0 0.0
    %267 = vmatprep.subr.mxu0 0.0
    %268 = vmatpush2.xpose.msra.mxu0 0.0
    %269 = vmatprep.subr.mxu0 0.0
    %270 = vmatpush2.xpose.msra.mxu0 0.0
    %271 = vmatprep.subr.mxu0 0.0
    %272 = vmatpush2.xpose.msra.mxu0 0.0
    %273 = vmatprep.subr.mxu0 0.0
    %274 = vmatpush2.xpose.msra.mxu0 0.0
    %275 = vmatprep.subr.mxu0 0.0
    %276 = vmatpush2.xpose.msra.mxu0 0.0
    %277 = vmatprep.subr.mxu0 0.0
    %278 = vmatpush2.xpose.msra.mxu0 0.0
    %279 = vmatprep.subr.mxu0 0.0
    %280 = vmatpush2.xpose.msra.mxu0 0.0
    %281 = vmatprep.mubr.f32.mxu0 0.0
    %282 = vmatmul.mubr.f32.gmra.mxu0 %v213
    %v283 = vpop.f32.mrf.mxu0
    %v284 = vadd.f32 0.0, %v283
    %v285 = vpop.f32.mrf.mxu0
    %286 = vdwg.mxu0
    %v287 = vsel %vm212, %v190, 0
    %v289 = vsel %vm212, %v198, 0
    %291 = vmatprep.subr.mxu0 0.0
    %292 = vmatpush1.xpose.msra.mxu0 0.0
    %293 = vmatprep.subr.mxu0 0.0
    %294 = vmatpush1.xpose.msra.mxu0 0.0
    %295 = vmatprep.subr.mxu0 0.0
    %296 = vmatpush1.xpose.msra.mxu0 0.0
    %297 = vmatprep.subr.mxu0 0.0
    %298 = vmatpush1.xpose.msra.mxu0 0.0
    %299 = vmatprep.subr.mxu0 0.0
    %300 = vmatpush1.xpose.msra.mxu0 0.0
    %301 = vmatprep.subr.mxu0 0.0
    %302 = vmatpush1.xpose.msra.mxu0 0.0
    %303 = vmatprep.subr.mxu0 0.0
    %304 = vmatpush1.xpose.msra.mxu0 0.0
    %305 = vmatprep.subr.mxu0 0.0
    %306 = vmatpush1.xpose.msra.mxu0 0.0
    %307 = vmatprep.subr.mxu0 0.0
    %308 = vmatpush1.xpose.msra.mxu0 0.0
    %309 = vmatprep.subr.mxu0 0.0
    %310 = vmatpush1.xpose.msra.mxu0 0.0
    %311 = vmatprep.subr.mxu0 0.0
    %312 = vmatpush1.xpose.msra.mxu0 0.0
    %313 = vmatprep.subr.mxu0 0.0
    %314 = vmatpush1.xpose.msra.mxu0 0.0
    %315 = vmatprep.subr.mxu0 0.0
    %316 = vmatpush1.xpose.msra.mxu0 0.0
    %317 = vmatprep.subr.mxu0 0.0
    %318 = vmatpush1.xpose.msra.mxu0 0.0
    %319 = vmatprep.subr.mxu0 0.0
    %320 = vmatpush1.xpose.msra.mxu0 0.0
    %321 = vmatprep.subr.mxu0 0.0
    %322 = vmatpush1.xpose.msra.mxu0 %v289
    %323 = vmatprep.subr.mxu0 0.0
    %324 = vmatpush2.xpose.msra.mxu0 0.0
    %325 = vmatprep.subr.mxu0 0.0
    %326 = vmatpush2.xpose.msra.mxu0 0.0
    %327 = vmatprep.subr.mxu0 0.0
    %328 = vmatpush2.xpose.msra.mxu0 0.0
    %329 = vmatprep.subr.mxu0 0.0
    %330 = vmatpush2.xpose.msra.mxu0 0.0
    %331 = vmatprep.subr.mxu0 0.0
    %332 = vmatpush2.xpose.msra.mxu0 0.0
    %333 = vmatprep.subr.mxu0 0.0
    %334 = vmatpush2.xpose.msra.mxu0 0.0
    %335 = vmatprep.subr.mxu0 0.0
    %336 = vmatpush2.xpose.msra.mxu0 0.0
    %337 = vmatprep.subr.mxu0 0.0
    %338 = vmatpush2.xpose.msra.mxu0 0.0
    %339 = vmatprep.subr.mxu0 0.0
    %340 = vmatpush2.xpose.msra.mxu0 0.0
    %341 = vmatprep.subr.mxu0 0.0
    %342 = vmatpush2.xpose.msra.mxu0 0.0
    %343 = vmatprep.subr.mxu0 0.0
    %344 = vmatpush2.xpose.msra.mxu0 0.0
    %345 = vmatprep.subr.mxu0 0.0
    %346 = vmatpush2.xpose.msra.mxu0 0.0
    %347 = vmatprep.subr.mxu0 0.0
    %348 = vmatpush2.xpose.msra.mxu0 0.0
    %349 = vmatprep.subr.mxu0 0.0
    %350 = vmatpush2.xpose.msra.mxu0 0.0
    %351 = vmatprep.subr.mxu0 0.0
    %352 = vmatpush2.xpose.msra.mxu0 0.0
    %353 = vmatprep.subr.mxu0 0.0
    %354 = vmatpush2.xpose.msra.mxu0 0.0
    %355 = vmatprep.mubr.f32.mxu0 0.0
    %356 = vmatmul.mubr.f32.gmra.mxu0 %v287
    %v357 = vpop.f32.mrf.mxu0
    %v358 = vadd.f32 0.0, %v357
    %v359 = vpop.f32.mrf.mxu0
    %360 = vdwg.mxu0
    %v361 = vmul.f32 %v284, 0.35355338
    %v362 = vmul.f32 %v358, 0.35355338
    %v363 = vadd.f32 %v361, %v53
    %v364 = vadd.f32 %v362, %v54
    %v365 = vsel %vm212, %v363, -inf
    %366 = vmax.xlane.f32.xlu0 %v365
    %v367 = vpop.xlane.xlu0 %366
    %v368 = vsel %vm212, %v364, -inf
    %369 = vmax.xlane.f32.xlu0 %v368
    %v370 = vpop.xlane.xlu0 %369
    %v371 = vsub.f32 %v363, %v367
    %v372 = vsub.f32 %v364, %v370
    %v373 = vmul.f32 %v371, 1.442695
    %v374 = vpow.pop %v373
    %v375 = vmul.f32 %v372, 1.442695
    %v376 = vpow.pop %v375
    %v377 = vsel %vm212, %v374, 0.0
    %378 = vadd.xlane.f32.xlu0 %v377
    %v379 = vpop.xlane.xlu0 %378
    %v380 = vsel %vm212, %v376, 0.0
    %381 = vadd.xlane.f32.xlu0 %v380
    %v382 = vpop.xlane.xlu0 %381
    %v383 = vrcp.pop %v379
    %v384 = vrcp.pop %v382
    %v385 = vmul.f32 %v374, %v383
    %v386 = vmul.f32 %v376, %v384
    %v388 = vsel %vm212, %v385, 0
    %390 = vmatprep.subr.mxu0 0.0
    %391 = vmatpush1.msra.mxu0 0.0
    %392 = vmatprep.subr.mxu0 0.0
    %393 = vmatpush1.msra.mxu0 0.0
    %394 = vmatprep.subr.mxu0 0.0
    %395 = vmatpush1.msra.mxu0 0.0
    %396 = vmatprep.subr.mxu0 0.0
    %397 = vmatpush1.msra.mxu0 0.0
    %398 = vmatprep.subr.mxu0 0.0
    %399 = vmatpush1.msra.mxu0 0.0
    %400 = vmatprep.subr.mxu0 0.0
    %401 = vmatpush1.msra.mxu0 0.0
    %402 = vmatprep.subr.mxu0 0.0
    %403 = vmatpush1.msra.mxu0 0.0
    %404 = vmatprep.subr.mxu0 0.0
    %405 = vmatpush1.msra.mxu0 0.0
    %406 = vmatprep.subr.mxu0 0.0
    %407 = vmatpush1.msra.mxu0 0.0
    %408 = vmatprep.subr.mxu0 0.0
    %409 = vmatpush1.msra.mxu0 0.0
    %410 = vmatprep.subr.mxu0 0.0
    %411 = vmatpush1.msra.mxu0 0.0
    %412 = vmatprep.subr.mxu0 0.0
    %413 = vmatpush1.msra.mxu0 0.0
    %414 = vmatprep.subr.mxu0 0.0
    %415 = vmatpush1.msra.mxu0 0.0
    %416 = vmatprep.subr.mxu0 0.0
    %417 = vmatpush1.msra.mxu0 0.0
    %418 = vmatprep.subr.mxu0 0.0
    %419 = vmatpush1.msra.mxu0 0.0
    %420 = vmatprep.subr.mxu0 0.0
    %421 = vmatpush1.msra.mxu0 %v204
    %422 = vmatprep.subr.mxu0 0.0
    %423 = vmatpush2.msra.mxu0 0.0
    %424 = vmatprep.subr.mxu0 0.0
    %425 = vmatpush2.msra.mxu0 0.0
    %426 = vmatprep.subr.mxu0 0.0
    %427 = vmatpush2.msra.mxu0 0.0
    %428 = vmatprep.subr.mxu0 0.0
    %429 = vmatpush2.msra.mxu0 0.0
    %430 = vmatprep.subr.mxu0 0.0
    %431 = vmatpush2.msra.mxu0 0.0
    %432 = vmatprep.subr.mxu0 0.0
    %433 = vmatpush2.msra.mxu0 0.0
    %434 = vmatprep.subr.mxu0 0.0
    %435 = vmatpush2.msra.mxu0 0.0
    %436 = vmatprep.subr.mxu0 0.0
    %437 = vmatpush2.msra.mxu0 0.0
    %438 = vmatprep.subr.mxu0 0.0
    %439 = vmatpush2.msra.mxu0 0.0
    %440 = vmatprep.subr.mxu0 0.0
    %441 = vmatpush2.msra.mxu0 0.0
    %442 = vmatprep.subr.mxu0 0.0
    %443 = vmatpush2.msra.mxu0 0.0
    %444 = vmatprep.subr.mxu0 0.0
    %445 = vmatpush2.msra.mxu0 0.0
    %446 = vmatprep.subr.mxu0 0.0
    %447 = vmatpush2.msra.mxu0 0.0
    %448 = vmatprep.subr.mxu0 0.0
    %449 = vmatpush2.msra.mxu0 0.0
    %450 = vmatprep.subr.mxu0 0.0
    %451 = vmatpush2.msra.mxu0 0.0
    %452 = vmatprep.subr.mxu0 0.0
    %453 = vmatpush2.msra.mxu0 0.0
    %454 = vmatprep.mubr.f32.mxu0 0.0
    %455 = vmatmul.mubr.f32.gmra.mxu0 %v388
    %v456 = vpop.f32.mrf.mxu0
    %v457 = vadd.f32 0.0, %v456
    %v458 = vpop.f32.mrf.mxu0
    %459 = vdwg.mxu0
    %v461 = vsel %vm212, %v386, 0
    %463 = vmatprep.subr.mxu0 0.0
    %464 = vmatpush1.msra.mxu0 0.0
    %465 = vmatprep.subr.mxu0 0.0
    %466 = vmatpush1.msra.mxu0 0.0
    %467 = vmatprep.subr.mxu0 0.0
    %468 = vmatpush1.msra.mxu0 0.0
    %469 = vmatprep.subr.mxu0 0.0
    %470 = vmatpush1.msra.mxu0 0.0
    %471 = vmatprep.subr.mxu0 0.0
    %472 = vmatpush1.msra.mxu0 0.0
    %473 = vmatprep.subr.mxu0 0.0
    %474 = vmatpush1.msra.mxu0 0.0
    %475 = vmatprep.subr.mxu0 0.0
    %476 = vmatpush1.msra.mxu0 0.0
    %477 = vmatprep.subr.mxu0 0.0
    %478 = vmatpush1.msra.mxu0 0.0
    %479 = vmatprep.subr.mxu0 0.0
    %480 = vmatpush1.msra.mxu0 0.0
    %481 = vmatprep.subr.mxu0 0.0
    %482 = vmatpush1.msra.mxu0 0.0
    %483 = vmatprep.subr.mxu0 0.0
    %484 = vmatpush1.msra.mxu0 0.0
    %485 = vmatprep.subr.mxu0 0.0
    %486 = vmatpush1.msra.mxu0 0.0
    %487 = vmatprep.subr.mxu0 0.0
    %488 = vmatpush1.msra.mxu0 0.0
    %489 = vmatprep.subr.mxu0 0.0
    %490 = vmatpush1.msra.mxu0 0.0
    %491 = vmatprep.subr.mxu0 0.0
    %492 = vmatpush1.msra.mxu0 0.0
    %493 = vmatprep.subr.mxu0 0.0
    %494 = vmatpush1.msra.mxu0 %v206
    %495 = vmatprep.subr.mxu0 0.0
    %496 = vmatpush2.msra.mxu0 0.0
    %497 = vmatprep.subr.mxu0 0.0
    %498 = vmatpush2.msra.mxu0 0.0
    %499 = vmatprep.subr.mxu0 0.0
    %500 = vmatpush2.msra.mxu0 0.0
    %501 = vmatprep.subr.mxu0 0.0
    %502 = vmatpush2.msra.mxu0 0.0
    %503 = vmatprep.subr.mxu0 0.0
    %504 = vmatpush2.msra.mxu0 0.0
    %505 = vmatprep.subr.mxu0 0.0
    %506 = vmatpush2.msra.mxu0 0.0
    %507 = vmatprep.subr.mxu0 0.0
    %508 = vmatpush2.msra.mxu0 0.0
    %509 = vmatprep.subr.mxu0 0.0
    %510 = vmatpush2.msra.mxu0 0.0
    %511 = vmatprep.subr.mxu0 0.0
    %512 = vmatpush2.msra.mxu0 0.0
    %513 = vmatprep.subr.mxu0 0.0
    %514 = vmatpush2.msra.mxu0 0.0
    %515 = vmatprep.subr.mxu0 0.0
    %516 = vmatpush2.msra.mxu0 0.0
    %517 = vmatprep.subr.mxu0 0.0
    %518 = vmatpush2.msra.mxu0 0.0
    %519 = vmatprep.subr.mxu0 0.0
    %520 = vmatpush2.msra.mxu0 0.0
    %521 = vmatprep.subr.mxu0 0.0
    %522 = vmatpush2.msra.mxu0 0.0
    %523 = vmatprep.subr.mxu0 0.0
    %524 = vmatpush2.msra.mxu0 0.0
    %525 = vmatprep.subr.mxu0 0.0
    %526 = vmatpush2.msra.mxu0 0.0
    %527 = vmatprep.mubr.f32.mxu0 0.0
    %528 = vmatmul.mubr.f32.gmra.mxu0 %v461
    %v529 = vpop.f32.mrf.mxu0
    %v530 = vadd.f32 0.0, %v529
    %v531 = vpop.f32.mrf.mxu0
    %532 = vdwg.mxu0
    %533 = vrot.lane.b32.xlu0 %v185, 120
    %v534 = vpop.permute.xlu0 %533
    %535 = vrot.lane.b32.xlu0 %v185, 88
    %v536 = vpop.permute.xlu0 %535
    %v537 = vsel %vm212, %v534, 0
    %v539 = vsel %vm212, %v536, 0
    %541 = vmatprep.subr.mxu0 0.0
    %542 = vmatpush1.xpose.msra.mxu0 0.0
    %543 = vmatprep.subr.mxu0 0.0
    %544 = vmatpush1.xpose.msra.mxu0 0.0
    %545 = vmatprep.subr.mxu0 0.0
    %546 = vmatpush1.xpose.msra.mxu0 0.0
    %547 = vmatprep.subr.mxu0 0.0
    %548 = vmatpush1.xpose.msra.mxu0 0.0
    %549 = vmatprep.subr.mxu0 0.0
    %550 = vmatpush1.xpose.msra.mxu0 0.0
    %551 = vmatprep.subr.mxu0 0.0
    %552 = vmatpush1.xpose.msra.mxu0 0.0
    %553 = vmatprep.subr.mxu0 0.0
    %554 = vmatpush1.xpose.msra.mxu0 0.0
    %555 = vmatprep.subr.mxu0 0.0
    %556 = vmatpush1.xpose.msra.mxu0 0.0
    %557 = vmatprep.subr.mxu0 0.0
    %558 = vmatpush1.xpose.msra.mxu0 0.0
    %559 = vmatprep.subr.mxu0 0.0
    %560 = vmatpush1.xpose.msra.mxu0 0.0
    %561 = vmatprep.subr.mxu0 0.0
    %562 = vmatpush1.xpose.msra.mxu0 0.0
    %563 = vmatprep.subr.mxu0 0.0
    %564 = vmatpush1.xpose.msra.mxu0 0.0
    %565 = vmatprep.subr.mxu0 0.0
    %566 = vmatpush1.xpose.msra.mxu0 0.0
    %567 = vmatprep.subr.mxu0 0.0
    %568 = vmatpush1.xpose.msra.mxu0 0.0
    %569 = vmatprep.subr.mxu0 0.0
    %570 = vmatpush1.xpose.msra.mxu0 0.0
    %571 = vmatprep.subr.mxu0 0.0
    %572 = vmatpush1.xpose.msra.mxu0 %v539
    %573 = vmatprep.subr.mxu0 0.0
    %574 = vmatpush2.xpose.msra.mxu0 0.0
    %575 = vmatprep.subr.mxu0 0.0
    %576 = vmatpush2.xpose.msra.mxu0 0.0
    %577 = vmatprep.subr.mxu0 0.0
    %578 = vmatpush2.xpose.msra.mxu0 0.0
    %579 = vmatprep.subr.mxu0 0.0
    %580 = vmatpush2.xpose.msra.mxu0 0.0
    %581 = vmatprep.subr.mxu0 0.0
    %582 = vmatpush2.xpose.msra.mxu0 0.0
    %583 = vmatprep.subr.mxu0 0.0
    %584 = vmatpush2.xpose.msra.mxu0 0.0
    %585 = vmatprep.subr.mxu0 0.0
    %586 = vmatpush2.xpose.msra.mxu0 0.0
    %587 = vmatprep.subr.mxu0 0.0
    %588 = vmatpush2.xpose.msra.mxu0 0.0
    %589 = vmatprep.subr.mxu0 0.0
    %590 = vmatpush2.xpose.msra.mxu0 0.0
    %591 = vmatprep.subr.mxu0 0.0
    %592 = vmatpush2.xpose.msra.mxu0 0.0
    %593 = vmatprep.subr.mxu0 0.0
    %594 = vmatpush2.xpose.msra.mxu0 0.0
    %595 = vmatprep.subr.mxu0 0.0
    %596 = vmatpush2.xpose.msra.mxu0 0.0
    %597 = vmatprep.subr.mxu0 0.0
    %598 = vmatpush2.xpose.msra.mxu0 0.0
    %599 = vmatprep.subr.mxu0 0.0
    %600 = vmatpush2.xpose.msra.mxu0 0.0
    %601 = vmatprep.subr.mxu0 0.0
    %602 = vmatpush2.xpose.msra.mxu0 0.0
    %603 = vmatprep.subr.mxu0 0.0
    %604 = vmatpush2.xpose.msra.mxu0 0.0
    %605 = vmatprep.mubr.f32.mxu0 0.0
    %606 = vmatmul.mubr.f32.gmra.mxu0 %v537
    %v607 = vpop.f32.mrf.mxu0
    %v608 = vadd.f32 0.0, %v607
    %v609 = vpop.f32.mrf.mxu0
    %610 = vdwg.mxu0
    %611 = vrot.lane.b32.xlu0 %v190, 120
    %v612 = vpop.permute.xlu0 %611
    %613 = vrot.lane.b32.xlu0 %v190, 88
    %v614 = vpop.permute.xlu0 %613
    %v615 = vsel %vm212, %v612, 0
    %v617 = vsel %vm212, %v614, 0
    %619 = vmatprep.subr.mxu0 0.0
    %620 = vmatpush1.xpose.msra.mxu0 0.0
    %621 = vmatprep.subr.mxu0 0.0
    %622 = vmatpush1.xpose.msra.mxu0 0.0
    %623 = vmatprep.subr.mxu0 0.0
    %624 = vmatpush1.xpose.msra.mxu0 0.0
    %625 = vmatprep.subr.mxu0 0.0
    %626 = vmatpush1.xpose.msra.mxu0 0.0
    %627 = vmatprep.subr.mxu0 0.0
    %628 = vmatpush1.xpose.msra.mxu0 0.0
    %629 = vmatprep.subr.mxu0 0.0
    %630 = vmatpush1.xpose.msra.mxu0 0.0
    %631 = vmatprep.subr.mxu0 0.0
    %632 = vmatpush1.xpose.msra.mxu0 0.0
    %633 = vmatprep.subr.mxu0 0.0
    %634 = vmatpush1.xpose.msra.mxu0 0.0
    %635 = vmatprep.subr.mxu0 0.0
    %636 = vmatpush1.xpose.msra.mxu0 0.0
    %637 = vmatprep.subr.mxu0 0.0
    %638 = vmatpush1.xpose.msra.mxu0 0.0
    %639 = vmatprep.subr.mxu0 0.0
    %640 = vmatpush1.xpose.msra.mxu0 0.0
    %641 = vmatprep.subr.mxu0 0.0
    %642 = vmatpush1.xpose.msra.mxu0 0.0
    %643 = vmatprep.subr.mxu0 0.0
    %644 = vmatpush1.xpose.msra.mxu0 0.0
    %645 = vmatprep.subr.mxu0 0.0
    %646 = vmatpush1.xpose.msra.mxu0 0.0
    %647 = vmatprep.subr.mxu0 0.0
    %648 = vmatpush1.xpose.msra.mxu0 0.0
    %649 = vmatprep.subr.mxu0 0.0
    %650 = vmatpush1.xpose.msra.mxu0 %v617
    %651 = vmatprep.subr.mxu0 0.0
    %652 = vmatpush2.xpose.msra.mxu0 0.0
    %653 = vmatprep.subr.mxu0 0.0
    %654 = vmatpush2.xpose.msra.mxu0 0.0
    %655 = vmatprep.subr.mxu0 0.0
    %656 = vmatpush2.xpose.msra.mxu0 0.0
    %657 = vmatprep.subr.mxu0 0.0
    %658 = vmatpush2.xpose.msra.mxu0 0.0
    %659 = vmatprep.subr.mxu0 0.0
    %660 = vmatpush2.xpose.msra.mxu0 0.0
    %661 = vmatprep.subr.mxu0 0.0
    %662 = vmatpush2.xpose.msra.mxu0 0.0
    %663 = vmatprep.subr.mxu0 0.0
    %664 = vmatpush2.xpose.msra.mxu0 0.0
    %665 = vmatprep.subr.mxu0 0.0
    %666 = vmatpush2.xpose.msra.mxu0 0.0
    %667 = vmatprep.subr.mxu0 0.0
    %668 = vmatpush2.xpose.msra.mxu0 0.0
    %669 = vmatprep.subr.mxu0 0.0
    %670 = vmatpush2.xpose.msra.mxu0 0.0
    %671 = vmatprep.subr.mxu0 0.0
    %672 = vmatpush2.xpose.msra.mxu0 0.0
    %673 = vmatprep.subr.mxu0 0.0
    %674 = vmatpush2.xpose.msra.mxu0 0.0
    %675 = vmatprep.subr.mxu0 0.0
    %676 = vmatpush2.xpose.msra.mxu0 0.0
    %677 = vmatprep.subr.mxu0 0.0
    %678 = vmatpush2.xpose.msra.mxu0 0.0
    %679 = vmatprep.subr.mxu0 0.0
    %680 = vmatpush2.xpose.msra.mxu0 0.0
    %681 = vmatprep.subr.mxu0 0.0
    %682 = vmatpush2.xpose.msra.mxu0 0.0
    %683 = vmatprep.mubr.f32.mxu0 0.0
    %684 = vmatmul.mubr.f32.gmra.mxu0 %v615
    %v685 = vpop.f32.mrf.mxu0
    %v686 = vadd.f32 0.0, %v685
    %v687 = vpop.f32.mrf.mxu0
    %688 = vdwg.mxu0
    %v689 = vmul.f32 %v608, 0.35355338
    %v690 = vmul.f32 %v686, 0.35355338
    %v691 = vadd.f32 %v689, %v53
    %v692 = vadd.f32 %v690, %v54
    %v693 = vsel %vm212, %v691, -inf
    %694 = vmax.xlane.f32.xlu0 %v693
    %v695 = vpop.xlane.xlu0 %694
    %v696 = vsel %vm212, %v692, -inf
    %697 = vmax.xlane.f32.xlu0 %v696
    %v698 = vpop.xlane.xlu0 %697
    %v699 = vsub.f32 %v691, %v695
    %v700 = vsub.f32 %v692, %v698
    %v701 = vmul.f32 %v699, 1.442695
    %v702 = vpow.pop %v701
    %v703 = vmul.f32 %v700, 1.442695
    %v704 = vpow.pop %v703
    %v705 = vsel %vm212, %v702, 0.0
    %706 = vadd.xlane.f32.xlu0 %v705
    %v707 = vpop.xlane.xlu0 %706
    %v708 = vsel %vm212, %v704, 0.0
    %709 = vadd.xlane.f32.xlu0 %v708
    %v710 = vpop.xlane.xlu0 %709
    %v711 = vrcp.pop %v707
    %v712 = vrcp.pop %v710
    %v713 = vmul.f32 %v702, %v711
    %v714 = vmul.f32 %v704, %v712
    %715 = vrot.lane.b32.xlu0 %v185, 56
    %v716 = vpop.permute.xlu0 %715
    %v719 = vsel %vm212, %v713, 0
    %721 = vmatprep.subr.mxu0 0.0
    %722 = vmatpush1.msra.mxu0 0.0
    %723 = vmatprep.subr.mxu0 0.0
    %724 = vmatpush1.msra.mxu0 0.0
    %725 = vmatprep.subr.mxu0 0.0
    %726 = vmatpush1.msra.mxu0 0.0
    %727 = vmatprep.subr.mxu0 0.0
    %728 = vmatpush1.msra.mxu0 0.0
    %729 = vmatprep.subr.mxu0 0.0
    %730 = vmatpush1.msra.mxu0 0.0
    %731 = vmatprep.subr.mxu0 0.0
    %732 = vmatpush1.msra.mxu0 0.0
    %733 = vmatprep.subr.mxu0 0.0
    %734 = vmatpush1.msra.mxu0 0.0
    %735 = vmatprep.subr.mxu0 0.0
    %736 = vmatpush1.msra.mxu0 0.0
    %737 = vmatprep.subr.mxu0 0.0
    %738 = vmatpush1.msra.mxu0 0.0
    %739 = vmatprep.subr.mxu0 0.0
    %740 = vmatpush1.msra.mxu0 0.0
    %741 = vmatprep.subr.mxu0 0.0
    %742 = vmatpush1.msra.mxu0 0.0
    %743 = vmatprep.subr.mxu0 0.0
    %744 = vmatpush1.msra.mxu0 0.0
    %745 = vmatprep.subr.mxu0 0.0
    %746 = vmatpush1.msra.mxu0 0.0
    %747 = vmatprep.subr.mxu0 0.0
    %748 = vmatpush1.msra.mxu0 0.0
    %749 = vmatprep.subr.mxu0 0.0
    %750 = vmatpush1.msra.mxu0 0.0
    %751 = vmatprep.subr.mxu0 0.0
    %752 = vmatpush1.msra.mxu0 %v716
    %753 = vmatprep.subr.mxu0 0.0
    %754 = vmatpush2.msra.mxu0 0.0
    %755 = vmatprep.subr.mxu0 0.0
    %756 = vmatpush2.msra.mxu0 0.0
    %757 = vmatprep.subr.mxu0 0.0
    %758 = vmatpush2.msra.mxu0 0.0
    %759 = vmatprep.subr.mxu0 0.0
    %760 = vmatpush2.msra.mxu0 0.0
    %761 = vmatprep.subr.mxu0 0.0
    %762 = vmatpush2.msra.mxu0 0.0
    %763 = vmatprep.subr.mxu0 0.0
    %764 = vmatpush2.msra.mxu0 0.0
    %765 = vmatprep.subr.mxu0 0.0
    %766 = vmatpush2.msra.mxu0 0.0
    %767 = vmatprep.subr.mxu0 0.0
    %768 = vmatpush2.msra.mxu0 0.0
    %769 = vmatprep.subr.mxu0 0.0
    %770 = vmatpush2.msra.mxu0 0.0
    %771 = vmatprep.subr.mxu0 0.0
    %772 = vmatpush2.msra.mxu0 0.0
    %773 = vmatprep.subr.mxu0 0.0
    %774 = vmatpush2.msra.mxu0 0.0
    %775 = vmatprep.subr.mxu0 0.0
    %776 = vmatpush2.msra.mxu0 0.0
    %777 = vmatprep.subr.mxu0 0.0
    %778 = vmatpush2.msra.mxu0 0.0
    %779 = vmatprep.subr.mxu0 0.0
    %780 = vmatpush2.msra.mxu0 0.0
    %781 = vmatprep.subr.mxu0 0.0
    %782 = vmatpush2.msra.mxu0 0.0
    %783 = vmatprep.subr.mxu0 0.0
    %784 = vmatpush2.msra.mxu0 0.0
    %785 = vmatprep.mubr.f32.mxu0 0.0
    %786 = vmatmul.mubr.f32.gmra.mxu0 %v719
    %v787 = vpop.f32.mrf.mxu0
    %v788 = vadd.f32 0.0, %v787
    %v789 = vpop.f32.mrf.mxu0
    %790 = vdwg.mxu0
    %791 = vrot.lane.b32.xlu0 %v190, 56
    %v792 = vpop.permute.xlu0 %791
    %v795 = vsel %vm212, %v714, 0
    %797 = vmatprep.subr.mxu0 0.0
    %798 = vmatpush1.msra.mxu0 0.0
    %799 = vmatprep.subr.mxu0 0.0
    %800 = vmatpush1.msra.mxu0 0.0
    %801 = vmatprep.subr.mxu0 0.0
    %802 = vmatpush1.msra.mxu0 0.0
    %803 = vmatprep.subr.mxu0 0.0
    %804 = vmatpush1.msra.mxu0 0.0
    %805 = vmatprep.subr.mxu0 0.0
    %806 = vmatpush1.msra.mxu0 0.0
    %807 = vmatprep.subr.mxu0 0.0
    %808 = vmatpush1.msra.mxu0 0.0
    %809 = vmatprep.subr.mxu0 0.0
    %810 = vmatpush1.msra.mxu0 0.0
    %811 = vmatprep.subr.mxu0 0.0
    %812 = vmatpush1.msra.mxu0 0.0
    %813 = vmatprep.subr.mxu0 0.0
    %814 = vmatpush1.msra.mxu0 0.0
    %815 = vmatprep.subr.mxu0 0.0
    %816 = vmatpush1.msra.mxu0 0.0
    %817 = vmatprep.subr.mxu0 0.0
    %818 = vmatpush1.msra.mxu0 0.0
    %819 = vmatprep.subr.mxu0 0.0
    %820 = vmatpush1.msra.mxu0 0.0
    %821 = vmatprep.subr.mxu0 0.0
    %822 = vmatpush1.msra.mxu0 0.0
    %823 = vmatprep.subr.mxu0 0.0
    %824 = vmatpush1.msra.mxu0 0.0
    %825 = vmatprep.subr.mxu0 0.0
    %826 = vmatpush1.msra.mxu0 0.0
    %827 = vmatprep.subr.mxu0 0.0
    %828 = vmatpush1.msra.mxu0 %v792
    %829 = vmatprep.subr.mxu0 0.0
    %830 = vmatpush2.msra.mxu0 0.0
    %831 = vmatprep.subr.mxu0 0.0
    %832 = vmatpush2.msra.mxu0 0.0
    %833 = vmatprep.subr.mxu0 0.0
    %834 = vmatpush2.msra.mxu0 0.0
    %835 = vmatprep.subr.mxu0 0.0
    %836 = vmatpush2.msra.mxu0 0.0
    %837 = vmatprep.subr.mxu0 0.0
    %838 = vmatpush2.msra.mxu0 0.0
    %839 = vmatprep.subr.mxu0 0.0
    %840 = vmatpush2.msra.mxu0 0.0
    %841 = vmatprep.subr.mxu0 0.0
    %842 = vmatpush2.msra.mxu0 0.0
    %843 = vmatprep.subr.mxu0 0.0
    %844 = vmatpush2.msra.mxu0 0.0
    %845 = vmatprep.subr.mxu0 0.0
    %846 = vmatpush2.msra.mxu0 0.0
    %847 = vmatprep.subr.mxu0 0.0
    %848 = vmatpush2.msra.mxu0 0.0
    %849 = vmatprep.subr.mxu0 0.0
    %850 = vmatpush2.msra.mxu0 0.0
    %851 = vmatprep.subr.mxu0 0.0
    %852 = vmatpush2.msra.mxu0 0.0
    %853 = vmatprep.subr.mxu0 0.0
    %854 = vmatpush2.msra.mxu0 0.0
    %855 = vmatprep.subr.mxu0 0.0
    %856 = vmatpush2.msra.mxu0 0.0
    %857 = vmatprep.subr.mxu0 0.0
    %858 = vmatpush2.msra.mxu0 0.0
    %859 = vmatprep.subr.mxu0 0.0
    %860 = vmatpush2.msra.mxu0 0.0
    %861 = vmatprep.mubr.f32.mxu0 0.0
    %862 = vmatmul.mubr.f32.gmra.mxu0 %v795
    %v863 = vpop.f32.mrf.mxu0
    %v864 = vadd.f32 0.0, %v863
    %v865 = vpop.f32.mrf.mxu0
    %866 = vdwg.mxu0
    %867 = vrot.lane.b32.xlu0 %v185, 112
    %v868 = vpop.permute.xlu0 %867
    %869 = vrot.lane.b32.xlu0 %v185, 80
    %v870 = vpop.permute.xlu0 %869
    %v871 = vsel %vm212, %v868, 0
    %v873 = vsel %vm212, %v870, 0
    %875 = vmatprep.subr.mxu0 0.0
    %876 = vmatpush1.xpose.msra.mxu0 0.0
    %877 = vmatprep.subr.mxu0 0.0
    %878 = vmatpush1.xpose.msra.mxu0 0.0
    %879 = vmatprep.subr.mxu0 0.0
    %880 = vmatpush1.xpose.msra.mxu0 0.0
    %881 = vmatprep.subr.mxu0 0.0
    %882 = vmatpush1.xpose.msra.mxu0 0.0
    %883 = vmatprep.subr.mxu0 0.0
    %884 = vmatpush1.xpose.msra.mxu0 0.0
    %885 = vmatprep.subr.mxu0 0.0
    %886 = vmatpush1.xpose.msra.mxu0 0.0
    %887 = vmatprep.subr.mxu0 0.0
    %888 = vmatpush1.xpose.msra.mxu0 0.0
    %889 = vmatprep.subr.mxu0 0.0
    %890 = vmatpush1.xpose.msra.mxu0 0.0
    %891 = vmatprep.subr.mxu0 0.0
    %892 = vmatpush1.xpose.msra.mxu0 0.0
    %893 = vmatprep.subr.mxu0 0.0
    %894 = vmatpush1.xpose.msra.mxu0 0.0
    %895 = vmatprep.subr.mxu0 0.0
    %896 = vmatpush1.xpose.msra.mxu0 0.0
    %897 = vmatprep.subr.mxu0 0.0
    %898 = vmatpush1.xpose.msra.mxu0 0.0
    %899 = vmatprep.subr.mxu0 0.0
    %900 = vmatpush1.xpose.msra.mxu0 0.0
    %901 = vmatprep.subr.mxu0 0.0
    %902 = vmatpush1.xpose.msra.mxu0 0.0
    %903 = vmatprep.subr.mxu0 0.0
    %904 = vmatpush1.xpose.msra.mxu0 0.0
    %905 = vmatprep.subr.mxu0 0.0
    %906 = vmatpush1.xpose.msra.mxu0 %v873
    %907 = vmatprep.subr.mxu0 0.0
    %908 = vmatpush2.xpose.msra.mxu0 0.0
    %909 = vmatprep.subr.mxu0 0.0
    %910 = vmatpush2.xpose.msra.mxu0 0.0
    %911 = vmatprep.subr.mxu0 0.0
    %912 = vmatpush2.xpose.msra.mxu0 0.0
    %913 = vmatprep.subr.mxu0 0.0
    %914 = vmatpush2.xpose.msra.mxu0 0.0
    %915 = vmatprep.subr.mxu0 0.0
    %916 = vmatpush2.xpose.msra.mxu0 0.0
    %917 = vmatprep.subr.mxu0 0.0
    %918 = vmatpush2.xpose.msra.mxu0 0.0
    %919 = vmatprep.subr.mxu0 0.0
    %920 = vmatpush2.xpose.msra.mxu0 0.0
    %921 = vmatprep.subr.mxu0 0.0
    %922 = vmatpush2.xpose.msra.mxu0 0.0
    %923 = vmatprep.subr.mxu0 0.0
    %924 = vmatpush2.xpose.msra.mxu0 0.0
    %925 = vmatprep.subr.mxu0 0.0
    %926 = vmatpush2.xpose.msra.mxu0 0.0
    %927 = vmatprep.subr.mxu0 0.0
    %928 = vmatpush2.xpose.msra.mxu0 0.0
    %929 = vmatprep.subr.mxu0 0.0
    %930 = vmatpush2.xpose.msra.mxu0 0.0
    %931 = vmatprep.subr.mxu0 0.0
    %932 = vmatpush2.xpose.msra.mxu0 0.0
    %933 = vmatprep.subr.mxu0 0.0
    %934 = vmatpush2.xpose.msra.mxu0 0.0
    %935 = vmatprep.subr.mxu0 0.0
    %936 = vmatpush2.xpose.msra.mxu0 0.0
    %937 = vmatprep.subr.mxu0 0.0
    %938 = vmatpush2.xpose.msra.mxu0 0.0
    %939 = vmatprep.mubr.f32.mxu0 0.0
    %940 = vmatmul.mubr.f32.gmra.mxu0 %v871
    %v941 = vpop.f32.mrf.mxu0
    %v942 = vadd.f32 0.0, %v941
    %v943 = vpop.f32.mrf.mxu0
    %944 = vdwg.mxu0
    %945 = vrot.lane.b32.xlu0 %v190, 112
    %v946 = vpop.permute.xlu0 %945
    %947 = vrot.lane.b32.xlu0 %v190, 80
    %v948 = vpop.permute.xlu0 %947
    %v949 = vsel %vm212, %v946, 0
    %v951 = vsel %vm212, %v948, 0
    %953 = vmatprep.subr.mxu0 0.0
    %954 = vmatpush1.xpose.msra.mxu0 0.0
    %955 = vmatprep.subr.mxu0 0.0
    %956 = vmatpush1.xpose.msra.mxu0 0.0
    %957 = vmatprep.subr.mxu0 0.0
    %958 = vmatpush1.xpose.msra.mxu0 0.0
    %959 = vmatprep.subr.mxu0 0.0
    %960 = vmatpush1.xpose.msra.mxu0 0.0
    %961 = vmatprep.subr.mxu0 0.0
    %962 = vmatpush1.xpose.msra.mxu0 0.0
    %963 = vmatprep.subr.mxu0 0.0
    %964 = vmatpush1.xpose.msra.mxu0 0.0
    %965 = vmatprep.subr.mxu0 0.0
    %966 = vmatpush1.xpose.msra.mxu0 0.0
    %967 = vmatprep.subr.mxu0 0.0
    %968 = vmatpush1.xpose.msra.mxu0 0.0
    %969 = vmatprep.subr.mxu0 0.0
    %970 = vmatpush1.xpose.msra.mxu0 0.0
    %971 = vmatprep.subr.mxu0 0.0
    %972 = vmatpush1.xpose.msra.mxu0 0.0
    %973 = vmatprep.subr.mxu0 0.0
    %974 = vmatpush1.xpose.msra.mxu0 0.0
    %975 = vmatprep.subr.mxu0 0.0
    %976 = vmatpush1.xpose.msra.mxu0 0.0
    %977 = vmatprep.subr.mxu0 0.0
    %978 = vmatpush1.xpose.msra.mxu0 0.0
    %979 = vmatprep.subr.mxu0 0.0
    %980 = vmatpush1.xpose.msra.mxu0 0.0
    %981 = vmatprep.subr.mxu0 0.0
    %982 = vmatpush1.xpose.msra.mxu0 0.0
    %983 = vmatprep.subr.mxu0 0.0
    %984 = vmatpush1.xpose.msra.mxu0 %v951
    %985 = vmatprep.subr.mxu0 0.0
    %986 = vmatpush2.xpose.msra.mxu0 0.0
    %987 = vmatprep.subr.mxu0 0.0
    %988 = vmatpush2.xpose.msra.mxu0 0.0
    %989 = vmatprep.subr.mxu0 0.0
    %990 = vmatpush2.xpose.msra.mxu0 0.0
    %991 = vmatprep.subr.mxu0 0.0
    %992 = vmatpush2.xpose.msra.mxu0 0.0
    %993 = vmatprep.subr.mxu0 0.0
    %994 = vmatpush2.xpose.msra.mxu0 0.0
    %995 = vmatprep.subr.mxu0 0.0
    %996 = vmatpush2.xpose.msra.mxu0 0.0
    %997 = vmatprep.subr.mxu0 0.0
    %998 = vmatpush2.xpose.msra.mxu0 0.0
    %999 = vmatprep.subr.mxu0 0.0
    %1000 = vmatpush2.xpose.msra.mxu0 0.0
    %1001 = vmatprep.subr.mxu0 0.0
    %1002 = vmatpush2.xpose.msra.mxu0 0.0
    %1003 = vmatprep.subr.mxu0 0.0
    %1004 = vmatpush2.xpose.msra.mxu0 0.0
    %1005 = vmatprep.subr.mxu0 0.0
    %1006 = vmatpush2.xpose.msra.mxu0 0.0
    %1007 = vmatprep.subr.mxu0 0.0
    %1008 = vmatpush2.xpose.msra.mxu0 0.0
    %1009 = vmatprep.subr.mxu0 0.0
    %1010 = vmatpush2.xpose.msra.mxu0 0.0
    %1011 = vmatprep.subr.mxu0 0.0
    %1012 = vmatpush2.xpose.msra.mxu0 0.0
    %1013 = vmatprep.subr.mxu0 0.0
    %1014 = vmatpush2.xpose.msra.mxu0 0.0
    %1015 = vmatprep.subr.mxu0 0.0
    %1016 = vmatpush2.xpose.msra.mxu0 0.0
    %1017 = vmatprep.mubr.f32.mxu0 0.0
    %1018 = vmatmul.mubr.f32.gmra.mxu0 %v949
    %v1019 = vpop.f32.mrf.mxu0
    %v1020 = vadd.f32 0.0, %v1019
    %v1021 = vpop.f32.mrf.mxu0
    %1022 = vdwg.mxu0
    %v1023 = vmul.f32 %v942, 0.35355338
    %v1024 = vmul.f32 %v1020, 0.35355338
    %v1025 = vadd.f32 %v1023, %v53
    %v1026 = vadd.f32 %v1024, %v54
    %v1027 = vsel %vm212, %v1025, -inf
    %1028 = vmax.xlane.f32.xlu0 %v1027
    %v1029 = vpop.xlane.xlu0 %1028
    %v1030 = vsel %vm212, %v1026, -inf
    %1031 = vmax.xlane.f32.xlu0 %v1030
    %v1032 = vpop.xlane.xlu0 %1031
    %v1033 = vsub.f32 %v1025, %v1029
    %v1034 = vsub.f32 %v1026, %v1032
    %v1035 = vmul.f32 %v1033, 1.442695
    %v1036 = vpow.pop %v1035
    %v1037 = vmul.f32 %v1034, 1.442695
    %v1038 = vpow.pop %v1037
    %v1039 = vsel %vm212, %v1036, 0.0
    %1040 = vadd.xlane.f32.xlu0 %v1039
    %v1041 = vpop.xlane.xlu0 %1040
    %v1042 = vsel %vm212, %v1038, 0.0
    %1043 = vadd.xlane.f32.xlu0 %v1042
    %v1044 = vpop.xlane.xlu0 %1043
    %v1045 = vrcp.pop %v1041
    %v1046 = vrcp.pop %v1044
    %v1047 = vmul.f32 %v1036, %v1045
    %v1048 = vmul.f32 %v1038, %v1046
    %1049 = vrot.lane.b32.xlu0 %v185, 48
    %v1050 = vpop.permute.xlu0 %1049
    %v1053 = vsel %vm212, %v1047, 0
    %1055 = vmatprep.subr.mxu0 0.0
    %1056 = vmatpush1.msra.mxu0 0.0
    %1057 = vmatprep.subr.mxu0 0.0
    %1058 = vmatpush1.msra.mxu0 0.0
    %1059 = vmatprep.subr.mxu0 0.0
    %1060 = vmatpush1.msra.mxu0 0.0
    %1061 = vmatprep.subr.mxu0 0.0
    %1062 = vmatpush1.msra.mxu0 0.0
    %1063 = vmatprep.subr.mxu0 0.0
    %1064 = vmatpush1.msra.mxu0 0.0
    %1065 = vmatprep.subr.mxu0 0.0
    %1066 = vmatpush1.msra.mxu0 0.0
    %1067 = vmatprep.subr.mxu0 0.0
    %1068 = vmatpush1.msra.mxu0 0.0
    %1069 = vmatprep.subr.mxu0 0.0
    %1070 = vmatpush1.msra.mxu0 0.0
    %1071 = vmatprep.subr.mxu0 0.0
    %1072 = vmatpush1.msra.mxu0 0.0
    %1073 = vmatprep.subr.mxu0 0.0
    %1074 = vmatpush1.msra.mxu0 0.0
    %1075 = vmatprep.subr.mxu0 0.0
    %1076 = vmatpush1.msra.mxu0 0.0
    %1077 = vmatprep.subr.mxu0 0.0
    %1078 = vmatpush1.msra.mxu0 0.0
    %1079 = vmatprep.subr.mxu0 0.0
    %1080 = vmatpush1.msra.mxu0 0.0
    %1081 = vmatprep.subr.mxu0 0.0
    %1082 = vmatpush1.msra.mxu0 0.0
    %1083 = vmatprep.subr.mxu0 0.0
    %1084 = vmatpush1.msra.mxu0 0.0
    %1085 = vmatprep.subr.mxu0 0.0
    %1086 = vmatpush1.msra.mxu0 %v1050
    %1087 = vmatprep.subr.mxu0 0.0
    %1088 = vmatpush2.msra.mxu0 0.0
    %1089 = vmatprep.subr.mxu0 0.0
    %1090 = vmatpush2.msra.mxu0 0.0
    %1091 = vmatprep.subr.mxu0 0.0
    %1092 = vmatpush2.msra.mxu0 0.0
    %1093 = vmatprep.subr.mxu0 0.0
    %1094 = vmatpush2.msra.mxu0 0.0
    %1095 = vmatprep.subr.mxu0 0.0
    %1096 = vmatpush2.msra.mxu0 0.0
    %1097 = vmatprep.subr.mxu0 0.0
    %1098 = vmatpush2.msra.mxu0 0.0
    %1099 = vmatprep.subr.mxu0 0.0
    %1100 = vmatpush2.msra.mxu0 0.0
    %1101 = vmatprep.subr.mxu0 0.0
    %1102 = vmatpush2.msra.mxu0 0.0
    %1103 = vmatprep.subr.mxu0 0.0
    %1104 = vmatpush2.msra.mxu0 0.0
    %1105 = vmatprep.subr.mxu0 0.0
    %1106 = vmatpush2.msra.mxu0 0.0
    %1107 = vmatprep.subr.mxu0 0.0
    %1108 = vmatpush2.msra.mxu0 0.0
    %1109 = vmatprep.subr.mxu0 0.0
    %1110 = vmatpush2.msra.mxu0 0.0
    %1111 = vmatprep.subr.mxu0 0.0
    %1112 = vmatpush2.msra.mxu0 0.0
    %1113 = vmatprep.subr.mxu0 0.0
    %1114 = vmatpush2.msra.mxu0 0.0
    %1115 = vmatprep.subr.mxu0 0.0
    %1116 = vmatpush2.msra.mxu0 0.0
    %1117 = vmatprep.subr.mxu0 0.0
    %1118 = vmatpush2.msra.mxu0 0.0
    %1119 = vmatprep.mubr.f32.mxu0 0.0
    %1120 = vmatmul.mubr.f32.gmra.mxu0 %v1053
    %v1121 = vpop.f32.mrf.mxu0
    %v1122 = vadd.f32 0.0, %v1121
    %v1123 = vpop.f32.mrf.mxu0
    %1124 = vdwg.mxu0
    %1125 = vrot.lane.b32.xlu0 %v190, 48
    %v1126 = vpop.permute.xlu0 %1125
    %v1129 = vsel %vm212, %v1048, 0
    %1131 = vmatprep.subr.mxu0 0.0
    %1132 = vmatpush1.msra.mxu0 0.0
    %1133 = vmatprep.subr.mxu0 0.0
    %1134 = vmatpush1.msra.mxu0 0.0
    %1135 = vmatprep.subr.mxu0 0.0
    %1136 = vmatpush1.msra.mxu0 0.0
    %1137 = vmatprep.subr.mxu0 0.0
    %1138 = vmatpush1.msra.mxu0 0.0
    %1139 = vmatprep.subr.mxu0 0.0
    %1140 = vmatpush1.msra.mxu0 0.0
    %1141 = vmatprep.subr.mxu0 0.0
    %1142 = vmatpush1.msra.mxu0 0.0
    %1143 = vmatprep.subr.mxu0 0.0
    %1144 = vmatpush1.msra.mxu0 0.0
    %1145 = vmatprep.subr.mxu0 0.0
    %1146 = vmatpush1.msra.mxu0 0.0
    %1147 = vmatprep.subr.mxu0 0.0
    %1148 = vmatpush1.msra.mxu0 0.0
    %1149 = vmatprep.subr.mxu0 0.0
    %1150 = vmatpush1.msra.mxu0 0.0
    %1151 = vmatprep.subr.mxu0 0.0
    %1152 = vmatpush1.msra.mxu0 0.0
    %1153 = vmatprep.subr.mxu0 0.0
    %1154 = vmatpush1.msra.mxu0 0.0
    %1155 = vmatprep.subr.mxu0 0.0
    %1156 = vmatpush1.msra.mxu0 0.0
    %1157 = vmatprep.subr.mxu0 0.0
    %1158 = vmatpush1.msra.mxu0 0.0
    %1159 = vmatprep.subr.mxu0 0.0
    %1160 = vmatpush1.msra.mxu0 0.0
    %1161 = vmatprep.subr.mxu0 0.0
    %1162 = vmatpush1.msra.mxu0 %v1126
    %1163 = vmatprep.subr.mxu0 0.0
    %1164 = vmatpush2.msra.mxu0 0.0
    %1165 = vmatprep.subr.mxu0 0.0
    %1166 = vmatpush2.msra.mxu0 0.0
    %1167 = vmatprep.subr.mxu0 0.0
    %1168 = vmatpush2.msra.mxu0 0.0
    %1169 = vmatprep.subr.mxu0 0.0
    %1170 = vmatpush2.msra.mxu0 0.0
    %1171 = vmatprep.subr.mxu0 0.0
    %1172 = vmatpush2.msra.mxu0 0.0
    %1173 = vmatprep.subr.mxu0 0.0
    %1174 = vmatpush2.msra.mxu0 0.0
    %1175 = vmatprep.subr.mxu0 0.0
    %1176 = vmatpush2.msra.mxu0 0.0
    %1177 = vmatprep.subr.mxu0 0.0
    %1178 = vmatpush2.msra.mxu0 0.0
    %1179 = vmatprep.subr.mxu0 0.0
    %1180 = vmatpush2.msra.mxu0 0.0
    %1181 = vmatprep.subr.mxu0 0.0
    %1182 = vmatpush2.msra.mxu0 0.0
    %1183 = vmatprep.subr.mxu0 0.0
    %1184 = vmatpush2.msra.mxu0 0.0
    %1185 = vmatprep.subr.mxu0 0.0
    %1186 = vmatpush2.msra.mxu0 0.0
    %1187 = vmatprep.subr.mxu0 0.0
    %1188 = vmatpush2.msra.mxu0 0.0
    %1189 = vmatprep.subr.mxu0 0.0
    %1190 = vmatpush2.msra.mxu0 0.0
    %1191 = vmatprep.subr.mxu0 0.0
    %1192 = vmatpush2.msra.mxu0 0.0
    %1193 = vmatprep.subr.mxu0 0.0
    %1194 = vmatpush2.msra.mxu0 0.0
    %1195 = vmatprep.mubr.f32.mxu0 0.0
    %1196 = vmatmul.mubr.f32.gmra.mxu0 %v1129
    %v1197 = vpop.f32.mrf.mxu0
    %v1198 = vadd.f32 0.0, %v1197
    %v1199 = vpop.f32.mrf.mxu0
    %1200 = vdwg.mxu0
    %1201 = vrot.lane.b32.xlu0 %v185, 104
    %v1202 = vpop.permute.xlu0 %1201
    %1203 = vrot.lane.b32.xlu0 %v185, 72
    %v1204 = vpop.permute.xlu0 %1203
    %v1205 = vsel %vm212, %v1202, 0
    %v1207 = vsel %vm212, %v1204, 0
    %1209 = vmatprep.subr.mxu0 0.0
    %1210 = vmatpush1.xpose.msra.mxu0 0.0
    %1211 = vmatprep.subr.mxu0 0.0
    %1212 = vmatpush1.xpose.msra.mxu0 0.0
    %1213 = vmatprep.subr.mxu0 0.0
    %1214 = vmatpush1.xpose.msra.mxu0 0.0
    %1215 = vmatprep.subr.mxu0 0.0
    %1216 = vmatpush1.xpose.msra.mxu0 0.0
    %1217 = vmatprep.subr.mxu0 0.0
    %1218 = vmatpush1.xpose.msra.mxu0 0.0
    %1219 = vmatprep.subr.mxu0 0.0
    %1220 = vmatpush1.xpose.msra.mxu0 0.0
    %1221 = vmatprep.subr.mxu0 0.0
    %1222 = vmatpush1.xpose.msra.mxu0 0.0
    %1223 = vmatprep.subr.mxu0 0.0
    %1224 = vmatpush1.xpose.msra.mxu0 0.0
    %1225 = vmatprep.subr.mxu0 0.0
    %1226 = vmatpush1.xpose.msra.mxu0 0.0
    %1227 = vmatprep.subr.mxu0 0.0
    %1228 = vmatpush1.xpose.msra.mxu0 0.0
    %1229 = vmatprep.subr.mxu0 0.0
    %1230 = vmatpush1.xpose.msra.mxu0 0.0
    %1231 = vmatprep.subr.mxu0 0.0
    %1232 = vmatpush1.xpose.msra.mxu0 0.0
    %1233 = vmatprep.subr.mxu0 0.0
    %1234 = vmatpush1.xpose.msra.mxu0 0.0
    %1235 = vmatprep.subr.mxu0 0.0
    %1236 = vmatpush1.xpose.msra.mxu0 0.0
    %1237 = vmatprep.subr.mxu0 0.0
    %1238 = vmatpush1.xpose.msra.mxu0 0.0
    %1239 = vmatprep.subr.mxu0 0.0
    %1240 = vmatpush1.xpose.msra.mxu0 %v1207
    %1241 = vmatprep.subr.mxu0 0.0
    %1242 = vmatpush2.xpose.msra.mxu0 0.0
    %1243 = vmatprep.subr.mxu0 0.0
    %1244 = vmatpush2.xpose.msra.mxu0 0.0
    %1245 = vmatprep.subr.mxu0 0.0
    %1246 = vmatpush2.xpose.msra.mxu0 0.0
    %1247 = vmatprep.subr.mxu0 0.0
    %1248 = vmatpush2.xpose.msra.mxu0 0.0
    %1249 = vmatprep.subr.mxu0 0.0
    %1250 = vmatpush2.xpose.msra.mxu0 0.0
    %1251 = vmatprep.subr.mxu0 0.0
    %1252 = vmatpush2.xpose.msra.mxu0 0.0
    %1253 = vmatprep.subr.mxu0 0.0
    %1254 = vmatpush2.xpose.msra.mxu0 0.0
    %1255 = vmatprep.subr.mxu0 0.0
    %1256 = vmatpush2.xpose.msra.mxu0 0.0
    %1257 = vmatprep.subr.mxu0 0.0
    %1258 = vmatpush2.xpose.msra.mxu0 0.0
    %1259 = vmatprep.subr.mxu0 0.0
    %1260 = vmatpush2.xpose.msra.mxu0 0.0
    %1261 = vmatprep.subr.mxu0 0.0
    %1262 = vmatpush2.xpose.msra.mxu0 0.0
    %1263 = vmatprep.subr.mxu0 0.0
    %1264 = vmatpush2.xpose.msra.mxu0 0.0
    %1265 = vmatprep.subr.mxu0 0.0
    %1266 = vmatpush2.xpose.msra.mxu0 0.0
    %1267 = vmatprep.subr.mxu0 0.0
    %1268 = vmatpush2.xpose.msra.mxu0 0.0
    %1269 = vmatprep.subr.mxu0 0.0
    %1270 = vmatpush2.xpose.msra.mxu0 0.0
    %1271 = vmatprep.subr.mxu0 0.0
    %1272 = vmatpush2.xpose.msra.mxu0 0.0
    %1273 = vmatprep.mubr.f32.mxu0 0.0
    %1274 = vmatmul.mubr.f32.gmra.mxu0 %v1205
    %v1275 = vpop.f32.mrf.mxu0
    %v1276 = vadd.f32 0.0, %v1275
    %v1277 = vpop.f32.mrf.mxu0
    %1278 = vdwg.mxu0
    %1279 = vrot.lane.b32.xlu0 %v190, 104
    %v1280 = vpop.permute.xlu0 %1279
    %1281 = vrot.lane.b32.xlu0 %v190, 72
    %v1282 = vpop.permute.xlu0 %1281
    %v1283 = vsel %vm212, %v1280, 0
    %v1285 = vsel %vm212, %v1282, 0
    %1287 = vmatprep.subr.mxu0 0.0
    %1288 = vmatpush1.xpose.msra.mxu0 0.0
    %1289 = vmatprep.subr.mxu0 0.0
    %1290 = vmatpush1.xpose.msra.mxu0 0.0
    %1291 = vmatprep.subr.mxu0 0.0
    %1292 = vmatpush1.xpose.msra.mxu0 0.0
    %1293 = vmatprep.subr.mxu0 0.0
    %1294 = vmatpush1.xpose.msra.mxu0 0.0
    %1295 = vmatprep.subr.mxu0 0.0
    %1296 = vmatpush1.xpose.msra.mxu0 0.0
    %1297 = vmatprep.subr.mxu0 0.0
    %1298 = vmatpush1.xpose.msra.mxu0 0.0
    %1299 = vmatprep.subr.mxu0 0.0
    %1300 = vmatpush1.xpose.msra.mxu0 0.0
    %1301 = vmatprep.subr.mxu0 0.0
    %1302 = vmatpush1.xpose.msra.mxu0 0.0
    %1303 = vmatprep.subr.mxu0 0.0
    %1304 = vmatpush1.xpose.msra.mxu0 0.0
    %1305 = vmatprep.subr.mxu0 0.0
    %1306 = vmatpush1.xpose.msra.mxu0 0.0
    %1307 = vmatprep.subr.mxu0 0.0
    %1308 = vmatpush1.xpose.msra.mxu0 0.0
    %1309 = vmatprep.subr.mxu0 0.0
    %1310 = vmatpush1.xpose.msra.mxu0 0.0
    %1311 = vmatprep.subr.mxu0 0.0
    %1312 = vmatpush1.xpose.msra.mxu0 0.0
    %1313 = vmatprep.subr.mxu0 0.0
    %1314 = vmatpush1.xpose.msra.mxu0 0.0
    %1315 = vmatprep.subr.mxu0 0.0
    %1316 = vmatpush1.xpose.msra.mxu0 0.0
    %1317 = vmatprep.subr.mxu0 0.0
    %1318 = vmatpush1.xpose.msra.mxu0 %v1285
    %1319 = vmatprep.subr.mxu0 0.0
    %1320 = vmatpush2.xpose.msra.mxu0 0.0
    %1321 = vmatprep.subr.mxu0 0.0
    %1322 = vmatpush2.xpose.msra.mxu0 0.0
    %1323 = vmatprep.subr.mxu0 0.0
    %1324 = vmatpush2.xpose.msra.mxu0 0.0
    %1325 = vmatprep.subr.mxu0 0.0
    %1326 = vmatpush2.xpose.msra.mxu0 0.0
    %1327 = vmatprep.subr.mxu0 0.0
    %1328 = vmatpush2.xpose.msra.mxu0 0.0
    %1329 = vmatprep.subr.mxu0 0.0
    %1330 = vmatpush2.xpose.msra.mxu0 0.0
    %1331 = vmatprep.subr.mxu0 0.0
    %1332 = vmatpush2.xpose.msra.mxu0 0.0
    %1333 = vmatprep.subr.mxu0 0.0
    %1334 = vmatpush2.xpose.msra.mxu0 0.0
    %1335 = vmatprep.subr.mxu0 0.0
    %1336 = vmatpush2.xpose.msra.mxu0 0.0
    %1337 = vmatprep.subr.mxu0 0.0
    %1338 = vmatpush2.xpose.msra.mxu0 0.0
    %1339 = vmatprep.subr.mxu0 0.0
    %1340 = vmatpush2.xpose.msra.mxu0 0.0
    %1341 = vmatprep.subr.mxu0 0.0
    %1342 = vmatpush2.xpose.msra.mxu0 0.0
    %1343 = vmatprep.subr.mxu0 0.0
    %1344 = vmatpush2.xpose.msra.mxu0 0.0
    %1345 = vmatprep.subr.mxu0 0.0
    %1346 = vmatpush2.xpose.msra.mxu0 0.0
    %1347 = vmatprep.subr.mxu0 0.0
    %1348 = vmatpush2.xpose.msra.mxu0 0.0
    %1349 = vmatprep.subr.mxu0 0.0
    %1350 = vmatpush2.xpose.msra.mxu0 0.0
    %1351 = vmatprep.mubr.f32.mxu0 0.0
    %1352 = vmatmul.mubr.f32.gmra.mxu0 %v1283
    %v1353 = vpop.f32.mrf.mxu0
    %v1354 = vadd.f32 0.0, %v1353
    %v1355 = vpop.f32.mrf.mxu0
    %1356 = vdwg.mxu0
    %v1357 = vmul.f32 %v1276, 0.35355338
    %v1358 = vmul.f32 %v1354, 0.35355338
    %v1359 = vadd.f32 %v1357, %v53
    %v1360 = vadd.f32 %v1358, %v54
    %v1361 = vsel %vm212, %v1359, -inf
    %1362 = vmax.xlane.f32.xlu0 %v1361
    %v1363 = vpop.xlane.xlu0 %1362
    %v1364 = vsel %vm212, %v1360, -inf
    %1365 = vmax.xlane.f32.xlu0 %v1364
    %v1366 = vpop.xlane.xlu0 %1365
    %v1367 = vsub.f32 %v1359, %v1363
    %v1368 = vsub.f32 %v1360, %v1366
    %v1369 = vmul.f32 %v1367, 1.442695
    %v1370 = vpow.pop %v1369
    %v1371 = vmul.f32 %v1368, 1.442695
    %v1372 = vpow.pop %v1371
    %v1373 = vsel %vm212, %v1370, 0.0
    %1374 = vadd.xlane.f32.xlu0 %v1373
    %v1375 = vpop.xlane.xlu0 %1374
    %v1376 = vsel %vm212, %v1372, 0.0
    %1377 = vadd.xlane.f32.xlu0 %v1376
    %v1378 = vpop.xlane.xlu0 %1377
    %v1379 = vrcp.pop %v1375
    %v1380 = vrcp.pop %v1378
    %v1381 = vmul.f32 %v1370, %v1379
    %v1382 = vmul.f32 %v1372, %v1380
    %1383 = vrot.lane.b32.xlu0 %v185, 40
    %v1384 = vpop.permute.xlu0 %1383
    %v1387 = vsel %vm212, %v1381, 0
    %1389 = vmatprep.subr.mxu0 0.0
    %1390 = vmatpush1.msra.mxu0 0.0
    %1391 = vmatprep.subr.mxu0 0.0
    %1392 = vmatpush1.msra.mxu0 0.0
    %1393 = vmatprep.subr.mxu0 0.0
    %1394 = vmatpush1.msra.mxu0 0.0
    %1395 = vmatprep.subr.mxu0 0.0
    %1396 = vmatpush1.msra.mxu0 0.0
    %1397 = vmatprep.subr.mxu0 0.0
    %1398 = vmatpush1.msra.mxu0 0.0
    %1399 = vmatprep.subr.mxu0 0.0
    %1400 = vmatpush1.msra.mxu0 0.0
    %1401 = vmatprep.subr.mxu0 0.0
    %1402 = vmatpush1.msra.mxu0 0.0
    %1403 = vmatprep.subr.mxu0 0.0
    %1404 = vmatpush1.msra.mxu0 0.0
    %1405 = vmatprep.subr.mxu0 0.0
    %1406 = vmatpush1.msra.mxu0 0.0
    %1407 = vmatprep.subr.mxu0 0.0
    %1408 = vmatpush1.msra.mxu0 0.0
    %1409 = vmatprep.subr.mxu0 0.0
    %1410 = vmatpush1.msra.mxu0 0.0
    %1411 = vmatprep.subr.mxu0 0.0
    %1412 = vmatpush1.msra.mxu0 0.0
    %1413 = vmatprep.subr.mxu0 0.0
    %1414 = vmatpush1.msra.mxu0 0.0
    %1415 = vmatprep.subr.mxu0 0.0
    %1416 = vmatpush1.msra.mxu0 0.0
    %1417 = vmatprep.subr.mxu0 0.0
    %1418 = vmatpush1.msra.mxu0 0.0
    %1419 = vmatprep.subr.mxu0 0.0
    %1420 = vmatpush1.msra.mxu0 %v1384
    %1421 = vmatprep.subr.mxu0 0.0
    %1422 = vmatpush2.msra.mxu0 0.0
    %1423 = vmatprep.subr.mxu0 0.0
    %1424 = vmatpush2.msra.mxu0 0.0
    %1425 = vmatprep.subr.mxu0 0.0
    %1426 = vmatpush2.msra.mxu0 0.0
    %1427 = vmatprep.subr.mxu0 0.0
    %1428 = vmatpush2.msra.mxu0 0.0
    %1429 = vmatprep.subr.mxu0 0.0
    %1430 = vmatpush2.msra.mxu0 0.0
    %1431 = vmatprep.subr.mxu0 0.0
    %1432 = vmatpush2.msra.mxu0 0.0
    %1433 = vmatprep.subr.mxu0 0.0
    %1434 = vmatpush2.msra.mxu0 0.0
    %1435 = vmatprep.subr.mxu0 0.0
    %1436 = vmatpush2.msra.mxu0 0.0
    %1437 = vmatprep.subr.mxu0 0.0
    %1438 = vmatpush2.msra.mxu0 0.0
    %1439 = vmatprep.subr.mxu0 0.0
    %1440 = vmatpush2.msra.mxu0 0.0
    %1441 = vmatprep.subr.mxu0 0.0
    %1442 = vmatpush2.msra.mxu0 0.0
    %1443 = vmatprep.subr.mxu0 0.0
    %1444 = vmatpush2.msra.mxu0 0.0
    %1445 = vmatprep.subr.mxu0 0.0
    %1446 = vmatpush2.msra.mxu0 0.0
    %1447 = vmatprep.subr.mxu0 0.0
    %1448 = vmatpush2.msra.mxu0 0.0
    %1449 = vmatprep.subr.mxu0 0.0
    %1450 = vmatpush2.msra.mxu0 0.0
    %1451 = vmatprep.subr.mxu0 0.0
    %1452 = vmatpush2.msra.mxu0 0.0
    %1453 = vmatprep.mubr.f32.mxu0 0.0
    %1454 = vmatmul.mubr.f32.gmra.mxu0 %v1387
    %v1455 = vpop.f32.mrf.mxu0
    %v1456 = vadd.f32 0.0, %v1455
    %v1457 = vpop.f32.mrf.mxu0
    %1458 = vdwg.mxu0
    %1459 = vrot.lane.b32.xlu0 %v190, 40
    %v1460 = vpop.permute.xlu0 %1459
    %v1463 = vsel %vm212, %v1382, 0
    %1465 = vmatprep.subr.mxu0 0.0
    %1466 = vmatpush1.msra.mxu0 0.0
    %1467 = vmatprep.subr.mxu0 0.0
    %1468 = vmatpush1.msra.mxu0 0.0
    %1469 = vmatprep.subr.mxu0 0.0
    %1470 = vmatpush1.msra.mxu0 0.0
    %1471 = vmatprep.subr.mxu0 0.0
    %1472 = vmatpush1.msra.mxu0 0.0
    %1473 = vmatprep.subr.mxu0 0.0
    %1474 = vmatpush1.msra.mxu0 0.0
    %1475 = vmatprep.subr.mxu0 0.0
    %1476 = vmatpush1.msra.mxu0 0.0
    %1477 = vmatprep.subr.mxu0 0.0
    %1478 = vmatpush1.msra.mxu0 0.0
    %1479 = vmatprep.subr.mxu0 0.0
    %1480 = vmatpush1.msra.mxu0 0.0
    %1481 = vmatprep.subr.mxu0 0.0
    %1482 = vmatpush1.msra.mxu0 0.0
    %1483 = vmatprep.subr.mxu0 0.0
    %1484 = vmatpush1.msra.mxu0 0.0
    %1485 = vmatprep.subr.mxu0 0.0
    %1486 = vmatpush1.msra.mxu0 0.0
    %1487 = vmatprep.subr.mxu0 0.0
    %1488 = vmatpush1.msra.mxu0 0.0
    %1489 = vmatprep.subr.mxu0 0.0
    %1490 = vmatpush1.msra.mxu0 0.0
    %1491 = vmatprep.subr.mxu0 0.0
    %1492 = vmatpush1.msra.mxu0 0.0
    %1493 = vmatprep.subr.mxu0 0.0
    %1494 = vmatpush1.msra.mxu0 0.0
    %1495 = vmatprep.subr.mxu0 0.0
    %1496 = vmatpush1.msra.mxu0 %v1460
    %1497 = vmatprep.subr.mxu0 0.0
    %1498 = vmatpush2.msra.mxu0 0.0
    %1499 = vmatprep.subr.mxu0 0.0
    %1500 = vmatpush2.msra.mxu0 0.0
    %1501 = vmatprep.subr.mxu0 0.0
    %1502 = vmatpush2.msra.mxu0 0.0
    %1503 = vmatprep.subr.mxu0 0.0
    %1504 = vmatpush2.msra.mxu0 0.0
    %1505 = vmatprep.subr.mxu0 0.0
    %1506 = vmatpush2.msra.mxu0 0.0
    %1507 = vmatprep.subr.mxu0 0.0
    %1508 = vmatpush2.msra.mxu0 0.0
    %1509 = vmatprep.subr.mxu0 0.0
    %1510 = vmatpush2.msra.mxu0 0.0
    %1511 = vmatprep.subr.mxu0 0.0
    %1512 = vmatpush2.msra.mxu0 0.0
    %1513 = vmatprep.subr.mxu0 0.0
    %1514 = vmatpush2.msra.mxu0 0.0
    %1515 = vmatprep.subr.mxu0 0.0
    %1516 = vmatpush2.msra.mxu0 0.0
    %1517 = vmatprep.subr.mxu0 0.0
    %1518 = vmatpush2.msra.mxu0 0.0
    %1519 = vmatprep.subr.mxu0 0.0
    %1520 = vmatpush2.msra.mxu0 0.0
    %1521 = vmatprep.subr.mxu0 0.0
    %1522 = vmatpush2.msra.mxu0 0.0
    %1523 = vmatprep.subr.mxu0 0.0
    %1524 = vmatpush2.msra.mxu0 0.0
    %1525 = vmatprep.subr.mxu0 0.0
    %1526 = vmatpush2.msra.mxu0 0.0
    %1527 = vmatprep.subr.mxu0 0.0
    %1528 = vmatpush2.msra.mxu0 0.0
    %1529 = vmatprep.mubr.f32.mxu0 0.0
    %1530 = vmatmul.mubr.f32.gmra.mxu0 %v1463
    %v1531 = vpop.f32.mrf.mxu0
    %v1532 = vadd.f32 0.0, %v1531
    %v1533 = vpop.f32.mrf.mxu0
    %1534 = vdwg.mxu0
    %1537 = vrot.lane.b32.xlu0 %v788, 8
    %v1538 = vpop.permute.xlu0 %1537
    %1539 = vrot.lane.b32.xlu0 %v864, 8
    %v1540 = vpop.permute.xlu0 %1539
    %1545 = vrot.lane.b32.xlu0 %v1122, 16
    %v1546 = vpop.permute.xlu0 %1545
    %1547 = vrot.lane.b32.xlu0 %v1198, 16
    %v1548 = vpop.permute.xlu0 %1547
    %1553 = vrot.lane.b32.xlu0 %v1456, 24
    %v1554 = vpop.permute.xlu0 %1553
    %1555 = vrot.lane.b32.xlu0 %v1532, 24
    %v1556 = vpop.permute.xlu0 %1555
    %v1559 = vsel %vm212, %v457, %v1538
    %v1560 = vsel %vm212, %v530, %v1540
    %vm1561 = vcmask 130048
    %v1562 = vsel %vm1561, %v1559, %v1546
    %v1563 = vsel %vm1561, %v1560, %v1548
    %vm1564 = vcmask 195584
    %v1565 = vsel %vm1564, %v1562, %v1554
    %v1566 = vsel %vm1564, %v1563, %v1556
    %v1567 = vld [vmem:[%s6] sm:$0xff]
    %v1568 = vld [vmem:[%s6 + $0x8] sm:$0xff]
    %v1569 = vld [vmem:[%s6 + $0x10] sm:$0xff]
    %v1570 = vld [vmem:[%s6 + $0x18] sm:$0xff]
    %v1571 = vld [vmem:[%s7] sm:$0x1]
    %v1573 = vlaneseq
    %v1574 = vshrl.u32 %v1573, 7
    %v1575 = vsub.s32 0, %v1574
    %v1576 = vrot.slane %v1571, %v1575
    %v1579 = vsel %vm57, %v1565, 0
    %v1582 = vsel %vm57, %v1566, 0
    %1584 = vmatprep.subr.mxu0 0.0
    %1585 = vmatpush1.msra.mxu0 0.0
    %1586 = vmatprep.subr.mxu0 0.0
    %1587 = vmatpush1.msra.mxu0 0.0
    %1588 = vmatprep.subr.mxu0 0.0
    %1589 = vmatpush1.msra.mxu0 0.0
    %1590 = vmatprep.subr.mxu0 0.0
    %1591 = vmatpush1.msra.mxu0 0.0
    %1592 = vmatprep.subr.mxu0 0.0
    %1593 = vmatpush1.msra.mxu0 0.0
    %1594 = vmatprep.subr.mxu0 0.0
    %1595 = vmatpush1.msra.mxu0 0.0
    %1596 = vmatprep.subr.mxu0 0.0
    %1597 = vmatpush1.msra.mxu0 0.0
    %1598 = vmatprep.subr.mxu0 0.0
    %1599 = vmatpush1.msra.mxu0 0.0
    %1600 = vmatprep.subr.mxu0 0.0
    %1601 = vmatpush1.msra.mxu0 0.0
    %1602 = vmatprep.subr.mxu0 0.0
    %1603 = vmatpush1.msra.mxu0 0.0
    %1604 = vmatprep.subr.mxu0 0.0
    %1605 = vmatpush1.msra.mxu0 0.0
    %1606 = vmatprep.subr.mxu0 0.0
    %1607 = vmatpush1.msra.mxu0 0.0
    %1608 = vmatprep.subr.mxu0 0.0
    %1609 = vmatpush1.msra.mxu0 %v1570
    %1610 = vmatprep.subr.mxu0 0.0
    %1611 = vmatpush1.msra.mxu0 %v1569
    %1612 = vmatprep.subr.mxu0 0.0
    %1613 = vmatpush1.msra.mxu0 %v1568
    %1614 = vmatprep.subr.mxu0 0.0
    %1615 = vmatpush1.msra.mxu0 %v1567
    %1616 = vmatprep.subr.mxu0 0.0
    %1617 = vmatpush2.msra.mxu0 0.0
    %1618 = vmatprep.subr.mxu0 0.0
    %1619 = vmatpush2.msra.mxu0 0.0
    %1620 = vmatprep.subr.mxu0 0.0
    %1621 = vmatpush2.msra.mxu0 0.0
    %1622 = vmatprep.subr.mxu0 0.0
    %1623 = vmatpush2.msra.mxu0 0.0
    %1624 = vmatprep.subr.mxu0 0.0
    %1625 = vmatpush2.msra.mxu0 0.0
    %1626 = vmatprep.subr.mxu0 0.0
    %1627 = vmatpush2.msra.mxu0 0.0
    %1628 = vmatprep.subr.mxu0 0.0
    %1629 = vmatpush2.msra.mxu0 0.0
    %1630 = vmatprep.subr.mxu0 0.0
    %1631 = vmatpush2.msra.mxu0 0.0
    %1632 = vmatprep.subr.mxu0 0.0
    %1633 = vmatpush2.msra.mxu0 0.0
    %1634 = vmatprep.subr.mxu0 0.0
    %1635 = vmatpush2.msra.mxu0 0.0
    %1636 = vmatprep.subr.mxu0 0.0
    %1637 = vmatpush2.msra.mxu0 0.0
    %1638 = vmatprep.subr.mxu0 0.0
    %1639 = vmatpush2.msra.mxu0 0.0
    %1640 = vmatprep.subr.mxu0 0.0
    %1641 = vmatpush2.msra.mxu0 0.0
    %1642 = vmatprep.subr.mxu0 0.0
    %1643 = vmatpush2.msra.mxu0 0.0
    %1644 = vmatprep.subr.mxu0 0.0
    %1645 = vmatpush2.msra.mxu0 0.0
    %1646 = vmatprep.subr.mxu0 0.0
    %1647 = vmatpush2.msra.mxu0 0.0
    %1648 = vmatprep.mubr.f32.mxu0 0.0
    %1649 = vmatmul.mubr.f32.gmra.mxu0 %v1579
    %v1650 = vpop.f32.mrf.mxu0
    %v1651 = vadd.f32 %v1576, %v1650
    %v1652 = vpop.f32.mrf.mxu0
    %1653 = vmatprep.mubr.f32.mxu0 0.0
    %1654 = vmatmul.mubr.f32.gmra.mxu0 %v1582
    %v1655 = vpop.f32.mrf.mxu0
    %v1656 = vadd.f32 %v1576, %v1655
    %v1657 = vpop.f32.mrf.mxu0
    %1658 = vdwg.mxu0
    %v1659 = vadd.f32 %v51, %v1651
    %v1660 = vadd.f32 %v52, %v1656
    %v1661 = vld [vmem:[%s8] sm:$0x1]
    %v1662 = vld [vmem:[%s9] sm:$0x1]
    %v1663 = vsel %vm57, %v1659, 0.0
    %1664 = vadd.xlane.f32.xlu0 %v1663
    %v1665 = vpop.xlane.xlu0 %1664
    %v1666 = vsel %vm57, %v1660, 0.0
    %1667 = vadd.xlane.f32.xlu0 %v1666
    %v1668 = vpop.xlane.xlu0 %1667
    %v1669 = vmul.f32 %v1665, %v64
    %v1670 = vmul.f32 %v1668, %v64
    %v1671 = vsub.f32 %v1659, %v1669
    %v1672 = vsub.f32 %v1660, %v1670
    %v1673 = vmul.f32 %v1671, %v1671
    %v1674 = vmul.f32 %v1672, %v1672
    %v1675 = vsel %vm57, %v1673, 0.0
    %1676 = vadd.xlane.f32.xlu0 %v1675
    %v1677 = vpop.xlane.xlu0 %1676
    %v1678 = vsel %vm57, %v1674, 0.0
    %1679 = vadd.xlane.f32.xlu0 %v1678
    %v1680 = vpop.xlane.xlu0 %1679
    %v1681 = vmul.f32 %v1677, %v64
    %v1682 = vmul.f32 %v1680, %v64
    %v1683 = vadd.f32 %v1681, 1e-05
    %v1684 = vadd.f32 %v1682, 1e-05
    %v1685 = vrsqrt.pop %v1683
    %v1686 = vrsqrt.pop %v1684
    %v1687 = vmul.f32 %v1671, %v1685
    %v1688 = vmul.f32 %v1672, %v1686
    %v1690 = vlaneseq
    %v1691 = vshrl.u32 %v1690, 7
    %v1692 = vsub.s32 0, %v1691
    %v1693 = vrot.slane %v1661, %v1692
    %v1695 = vmul.f32 %v1687, %v1693
    %v1696 = vmul.f32 %v1688, %v1693
    %v1698 = vlaneseq
    %v1699 = vshrl.u32 %v1698, 7
    %v1700 = vsub.s32 0, %v1699
    %v1701 = vrot.slane %v1662, %v1700
    %v1703 = vadd.f32 %v1695, %v1701
    %v1704 = vadd.f32 %v1696, %v1701
    %v1705 = vld [vmem:[%s10] sm:$0xff]
    %v1706 = vld [vmem:[%s10 + $0x8] sm:$0xff]
    %v1707 = vld [vmem:[%s10 + $0x10] sm:$0xff]
    %v1708 = vld [vmem:[%s10 + $0x18] sm:$0xff]
    %v1709 = vld [vmem:[%s11] sm:$0x1]
    %v1711 = vlaneseq
    %v1712 = vshrl.u32 %v1711, 7
    %v1713 = vsub.s32 0, %v1712
    %v1714 = vrot.slane %v1709, %v1713
    %v1717 = vsel %vm57, %v1703, 0
    %v1720 = vsel %vm57, %v1704, 0
    %1722 = vmatprep.subr.mxu0 0.0
    %1723 = vmatpush1.msra.mxu0 0.0
    %1724 = vmatprep.subr.mxu0 0.0
    %1725 = vmatpush1.msra.mxu0 0.0
    %1726 = vmatprep.subr.mxu0 0.0
    %1727 = vmatpush1.msra.mxu0 0.0
    %1728 = vmatprep.subr.mxu0 0.0
    %1729 = vmatpush1.msra.mxu0 0.0
    %1730 = vmatprep.subr.mxu0 0.0
    %1731 = vmatpush1.msra.mxu0 0.0
    %1732 = vmatprep.subr.mxu0 0.0
    %1733 = vmatpush1.msra.mxu0 0.0
    %1734 = vmatprep.subr.mxu0 0.0
    %1735 = vmatpush1.msra.mxu0 0.0
    %1736 = vmatprep.subr.mxu0 0.0
    %1737 = vmatpush1.msra.mxu0 0.0
    %1738 = vmatprep.subr.mxu0 0.0
    %1739 = vmatpush1.msra.mxu0 0.0
    %1740 = vmatprep.subr.mxu0 0.0
    %1741 = vmatpush1.msra.mxu0 0.0
    %1742 = vmatprep.subr.mxu0 0.0
    %1743 = vmatpush1.msra.mxu0 0.0
    %1744 = vmatprep.subr.mxu0 0.0
    %1745 = vmatpush1.msra.mxu0 0.0
    %1746 = vmatprep.subr.mxu0 0.0
    %1747 = vmatpush1.msra.mxu0 %v1708
    %1748 = vmatprep.subr.mxu0 0.0
    %1749 = vmatpush1.msra.mxu0 %v1707
    %1750 = vmatprep.subr.mxu0 0.0
    %1751 = vmatpush1.msra.mxu0 %v1706
    %1752 = vmatprep.subr.mxu0 0.0
    %1753 = vmatpush1.msra.mxu0 %v1705
    %1754 = vmatprep.subr.mxu0 0.0
    %1755 = vmatpush2.msra.mxu0 0.0
    %1756 = vmatprep.subr.mxu0 0.0
    %1757 = vmatpush2.msra.mxu0 0.0
    %1758 = vmatprep.subr.mxu0 0.0
    %1759 = vmatpush2.msra.mxu0 0.0
    %1760 = vmatprep.subr.mxu0 0.0
    %1761 = vmatpush2.msra.mxu0 0.0
    %1762 = vmatprep.subr.mxu0 0.0
    %1763 = vmatpush2.msra.mxu0 0.0
    %1764 = vmatprep.subr.mxu0 0.0
    %1765 = vmatpush2.msra.mxu0 0.0
    %1766 = vmatprep.subr.mxu0 0.0
    %1767 = vmatpush2.msra.mxu0 0.0
    %1768 = vmatprep.subr.mxu0 0.0
    %1769 = vmatpush2.msra.mxu0 0.0
    %1770 = vmatprep.subr.mxu0 0.0
    %1771 = vmatpush2.msra.mxu0 0.0
    %1772 = vmatprep.subr.mxu0 0.0
    %1773 = vmatpush2.msra.mxu0 0.0
    %1774 = vmatprep.subr.mxu0 0.0
    %1775 = vmatpush2.msra.mxu0 0.0
    %1776 = vmatprep.subr.mxu0 0.0
    %1777 = vmatpush2.msra.mxu0 0.0
    %1778 = vmatprep.subr.mxu0 0.0
    %1779 = vmatpush2.msra.mxu0 0.0
    %1780 = vmatprep.subr.mxu0 0.0
    %1781 = vmatpush2.msra.mxu0 0.0
    %1782 = vmatprep.subr.mxu0 0.0
    %1783 = vmatpush2.msra.mxu0 0.0
    %1784 = vmatprep.subr.mxu0 0.0
    %1785 = vmatpush2.msra.mxu0 0.0
    %1786 = vmatprep.mubr.f32.mxu0 0.0
    %1787 = vmatmul.mubr.f32.gmra.mxu0 %v1717
    %v1788 = vpop.f32.mrf.mxu0
    %v1789 = vadd.f32 %v1714, %v1788
    %v1790 = vpop.f32.mrf.mxu0
    %1791 = vmatprep.mubr.f32.mxu0 0.0
    %1792 = vmatmul.mubr.f32.gmra.mxu0 %v1720
    %v1793 = vpop.f32.mrf.mxu0
    %v1794 = vadd.f32 %v1714, %v1793
    %v1795 = vpop.f32.mrf.mxu0
    %1796 = vdwg.mxu0
    %v1797 = vmul.f32 %v1789, 0.5
    %v1798 = vmul.f32 %v1794, 0.5
    %v1799 = vmul.f32 %v1789, 0.044715
    %v1800 = vmul.f32 %v1794, 0.044715
    %v1801 = vmul.f32 %v1799, %v1789
    %v1802 = vmul.f32 %v1800, %v1794
    %v1803 = vmul.f32 %v1801, %v1789
    %v1804 = vmul.f32 %v1802, %v1794
    %v1805 = vadd.f32 %v1789, %v1803
    %v1806 = vadd.f32 %v1794, %v1804
    %v1807 = vmul.f32 %v1805, 0.7978846
    %v1808 = vmul.f32 %v1806, 0.7978846
    %v1809 = vtanh.pop %v1807
    %v1810 = vtanh.pop %v1808
    %v1811 = vadd.f32 %v1809, 1.0
    %v1812 = vadd.f32 %v1810, 1.0
    %v1813 = vmul.f32 %v1797, %v1811
    %v1814 = vmul.f32 %v1798, %v1812
    %v1815 = vld [vmem:[%s12] sm:$0xff]
    %v1816 = vld [vmem:[%s12 + $0x8] sm:$0xff]
    %v1817 = vld [vmem:[%s12 + $0x10] sm:$0xff]
    %v1818 = vld [vmem:[%s12 + $0x18] sm:$0xff]
    %v1819 = vld [vmem:[%s12 + $0x20] sm:$0xff]
    %v1820 = vld [vmem:[%s12 + $0x28] sm:$0xff]
    %v1821 = vld [vmem:[%s12 + $0x30] sm:$0xff]
    %v1822 = vld [vmem:[%s12 + $0x38] sm:$0xff]
    %v1823 = vld [vmem:[%s12 + $0x40] sm:$0xff]
    %v1824 = vld [vmem:[%s12 + $0x48] sm:$0xff]
    %v1825 = vld [vmem:[%s12 + $0x50] sm:$0xff]
    %v1826 = vld [vmem:[%s12 + $0x58] sm:$0xff]
    %v1827 = vld [vmem:[%s12 + $0x60] sm:$0xff]
    %v1828 = vld [vmem:[%s12 + $0x68] sm:$0xff]
    %v1829 = vld [vmem:[%s12 + $0x70] sm:$0xff]
    %v1830 = vld [vmem:[%s12 + $0x78] sm:$0xff]
    %v1831 = vld [vmem:[%s13] sm:$0x1]
    %v1833 = vlaneseq
    %v1834 = vshrl.u32 %v1833, 7
    %v1835 = vsub.s32 0, %v1834
    %v1836 = vrot.slane %v1831, %v1835
    %1838 = vmatprep.subr.mxu0 0.0
    %1839 = vmatpush1.msra.mxu0 %v1830
    %1840 = vmatprep.subr.mxu0 0.0
    %1841 = vmatpush1.msra.mxu0 %v1829
    %1842 = vmatprep.subr.mxu0 0.0
    %1843 = vmatpush1.msra.mxu0 %v1828
    %1844 = vmatprep.subr.mxu0 0.0
    %1845 = vmatpush1.msra.mxu0 %v1827
    %1846 = vmatprep.subr.mxu0 0.0
    %1847 = vmatpush1.msra.mxu0 %v1826
    %1848 = vmatprep.subr.mxu0 0.0
    %1849 = vmatpush1.msra.mxu0 %v1825
    %1850 = vmatprep.subr.mxu0 0.0
    %1851 = vmatpush1.msra.mxu0 %v1824
    %1852 = vmatprep.subr.mxu0 0.0
    %1853 = vmatpush1.msra.mxu0 %v1823
    %1854 = vmatprep.subr.mxu0 0.0
    %1855 = vmatpush1.msra.mxu0 %v1822
    %1856 = vmatprep.subr.mxu0 0.0
    %1857 = vmatpush1.msra.mxu0 %v1821
    %1858 = vmatprep.subr.mxu0 0.0
    %1859 = vmatpush1.msra.mxu0 %v1820
    %1860 = vmatprep.subr.mxu0 0.0
    %1861 = vmatpush1.msra.mxu0 %v1819
    %1862 = vmatprep.subr.mxu0 0.0
    %1863 = vmatpush1.msra.mxu0 %v1818
    %1864 = vmatprep.subr.mxu0 0.0
    %1865 = vmatpush1.msra.mxu0 %v1817
    %1866 = vmatprep.subr.mxu0 0.0
    %1867 = vmatpush1.msra.mxu0 %v1816
    %1868 = vmatprep.subr.mxu0 0.0
    %1869 = vmatpush1.msra.mxu0 %v1815
    %1870 = vmatprep.subr.mxu0 0.0
    %1871 = vmatpush2.msra.mxu0 0.0
    %1872 = vmatprep.subr.mxu0 0.0
    %1873 = vmatpush2.msra.mxu0 0.0
    %1874 = vmatprep.subr.mxu0 0.0
    %1875 = vmatpush2.msra.mxu0 0.0
    %1876 = vmatprep.subr.mxu0 0.0
    %1877 = vmatpush2.msra.mxu0 0.0
    %1878 = vmatprep.subr.mxu0 0.0
    %1879 = vmatpush2.msra.mxu0 0.0
    %1880 = vmatprep.subr.mxu0 0.0
    %1881 = vmatpush2.msra.mxu0 0.0
    %1882 = vmatprep.subr.mxu0 0.0
    %1883 = vmatpush2.msra.mxu0 0.0
    %1884 = vmatprep.subr.mxu0 0.0
    %1885 = vmatpush2.msra.mxu0 0.0
    %1886 = vmatprep.subr.mxu0 0.0
    %1887 = vmatpush2.msra.mxu0 0.0
    %1888 = vmatprep.subr.mxu0 0.0
    %1889 = vmatpush2.msra.mxu0 0.0
    %1890 = vmatprep.subr.mxu0 0.0
    %1891 = vmatpush2.msra.mxu0 0.0
    %1892 = vmatprep.subr.mxu0 0.0
    %1893 = vmatpush2.msra.mxu0 0.0
    %1894 = vmatprep.subr.mxu0 0.0
    %1895 = vmatpush2.msra.mxu0 0.0
    %1896 = vmatprep.subr.mxu0 0.0
    %1897 = vmatpush2.msra.mxu0 0.0
    %1898 = vmatprep.subr.mxu0 0.0
    %1899 = vmatpush2.msra.mxu0 0.0
    %1900 = vmatprep.subr.mxu0 0.0
    %1901 = vmatpush2.msra.mxu0 0.0
    %1902 = vmatprep.mubr.f32.mxu0 0.0
    %1903 = vmatmul.mubr.f32.gmra.mxu0 %v1813
    %v1904 = vpop.f32.mrf.mxu0
    %v1905 = vadd.f32 %v1836, %v1904
    %v1906 = vpop.f32.mrf.mxu0
    %1907 = vmatprep.mubr.f32.mxu0 0.0
    %1908 = vmatmul.mubr.f32.gmra.mxu0 %v1814
    %v1909 = vpop.f32.mrf.mxu0
    %v1910 = vadd.f32 %v1836, %v1909
    %v1911 = vpop.f32.mrf.mxu0
    %1912 = vdwg.mxu0
    %v1913 = vadd.f32 %v1659, %v1905
    %v1914 = vadd.f32 %v1660, %v1910
    %1915 = vst.msk [vmem:[#allocation2] sm:$0xff] %vm57, %v1913
    %1916 = vst.msk [vmem:[#allocation2 + $0x8] sm:$0xff] %vm57, %v1914
    // Predicated region
    $region58: #{tpu_custom_call.1} parent=1 // pred_check
      _
    $region59: #{tpu_custom_call.1} parent=1 // pred_check_branch
      %1918 = sbr.rel (0) target = $region61
    $region60: #{tpu_custom_call.1} parent=1 // pred_region
      %s1920 = ssub.s32 256, 256
      %1921 = vsyncadd [#allocation3], %s1920
      %s1922 = sshll.u32 [#allocation2], 4
      %s1923 = int_to_ptr.vmem [resolvable:$true] %s1922
      %1928 = dma.vmem_to_hbm [thread:$0]  %s1923, 256, %s14, [#allocation3], 128, 128, 8
    $region61: #{tpu_custom_call.1} parent=1 // pred_fallthru
      _
    // Predicated region
    $region62: #{tpu_custom_call.1} parent=1 // pred_check
      _
    $region63: #{tpu_custom_call.1} parent=1 // pred_check_branch
      %1930 = sbr.rel (0) target = $region65
    $region64: #{tpu_custom_call.1} parent=1 // pred_region
      %s1932 = ssub.s32 512, 512
      %1933 = vsyncadd [#allocation5], %s1932
      %s1934 = sshll.u32 [#allocation4], 4
      %s1935 = int_to_ptr.vmem [resolvable:$true] %s1934
      %1940 = dma.vmem_to_hbm [thread:$0]  %s1935, 512, %s15, [#allocation5], 128, 128, 8
    $region65: #{tpu_custom_call.1} parent=1 // pred_fallthru
      _
    // Predicated region
    $region66: #{tpu_custom_call.1} parent=1 // pred_check
      _
    $region67: #{tpu_custom_call.1} parent=1 // pred_check_branch
      %1942 = sbr.rel (0) target = $region69
    $region68: #{tpu_custom_call.1} parent=1 // pred_region
      %1943 = dma.done [#allocation3], 256
    $region69: #{tpu_custom_call.1} parent=1 // pred_fallthru
      _
    // Predicated region
    $region70: #{tpu_custom_call.1} parent=1 // pred_check
      _
    $region71: #{tpu_custom_call.1} parent=1 // pred_check_branch
      %1945 = sbr.rel (0) target = $region73
    $region72: #{tpu_custom_call.1} parent=1 // pred_region
      %1946 = dma.done [#allocation5], 512
    $region73: #{tpu_custom_call.1} parent=1 // pred_fallthru
      _
    %1947 = vsyncpa [#allocation3], 1
    %1948 = vsyncpa [#allocation5], 1

</llo_original>
